<compile_context>
chip_gen: v7x
topology: tpu7x:2x2x1
jax: 0.10.0
libtpu: 0.0.40
codegen_flags: <defaults>
</compile_context>

<pallas_src>
import functools
import math

import jax
import jax.numpy as jnp
from jax.experimental import pallas as pl
from jax.experimental.pallas import tpu as pltpu


def _vmem_limit_bytes():
    """Generation-aware scoped-VMEM budget: ~half of physical, clamped."""
    try:
        cap = int(pltpu.get_tpu_info().vmem_capacity_bytes)
    except Exception:
        cap = 64 * 1024 * 1024  # conservative fallback (v7x physical size)
    return int(min(max(cap // 2, 32 * 1024 * 1024), 96 * 1024 * 1024))


# ----------------------------------------------------------------------------
# Fused decoder-layer kernel: one grid step == one batch element.
# ----------------------------------------------------------------------------
def _decoder_layer_kernel(*refs, num_heads, d_k, has_tmask, has_smask):
    e = num_heads * d_k
    pos = 0
    x_ref = refs[pos]; pos += 1
    mem_ref = refs[pos]; pos += 1
    tmask_ref = None
    smask_ref = None
    if has_tmask:
        tmask_ref = refs[pos]; pos += 1
    if has_smask:
        smask_ref = refs[pos]; pos += 1
    (sa_wqkv, sa_bqkv, sa_wo, sa_bo, sa_g, sa_beta,
     ca_wq, ca_bq, ca_wkv, ca_bkv, ca_wo, ca_bo, ca_g, ca_beta,
     ff_w1, ff_b1, ff_w2, ff_b2,
     o_ref, attn_scratch) = refs[pos:]

    inv_sqrt_dk = jnp.float32(1.0 / math.sqrt(d_k))

    def mha_core(q_f32, k_f32, v_f32, mask_ref_local,
                 wo_ref, bo_ref, g_ref, beta_ref):
        """Per-head attention -> out-proj + residual + LayerNorm (f32 out)."""
        q_bf = (q_f32 * inv_sqrt_dk).astype(jnp.bfloat16)  # fold scale into q
        k_bf = k_f32.astype(jnp.bfloat16)
        v_bf = v_f32.astype(jnp.bfloat16)
        masked = None if mask_ref_local is None else (mask_ref_local[0] == 0)

        for h in range(num_heads):                      # static unroll
            sl = slice(h * d_k, (h + 1) * d_k)
            # scores_h = q_h @ k_h^T  (contract over d_k) on the MXU, f32 acc
            scores = jax.lax.dot_general(
                q_bf[:, sl], k_bf[:, sl],
                dimension_numbers=(((1,), (1,)), ((), ())),
                preferred_element_type=jnp.float32)
            if masked is not None:
                # Reference fills masked positions with 1e-9 (kept verbatim).
                scores = jnp.where(masked, jnp.float32(1e-9), scores)
            scores = scores - jnp.max(scores, axis=-1, keepdims=True)
            p = jnp.exp(scores)
            p = p * pl.reciprocal(jnp.sum(p, axis=-1, keepdims=True),
                                  approx=True)
            # TODO(synk): dropout on attention weights skipped (eval mode).
            attn_scratch[:, sl] = jnp.dot(
                p.astype(jnp.bfloat16), v_bf[:, sl],
                preferred_element_type=jnp.float32)     # direct per-head store

        xc = attn_scratch[...]                          # (S, E) concat-heads
        # Residual taken from the attention-concat tensor (matches the
        # previously validated reference implementation).
        # TODO(synk): dropout on the projection output skipped (eval mode).
        y = xc + (jnp.dot(xc.astype(jnp.bfloat16), wo_ref[...],
                          preferred_element_type=jnp.float32) + bo_ref[...])
        mu = jnp.mean(y, axis=-1, keepdims=True)
        var = jnp.mean(jnp.square(y - mu), axis=-1, keepdims=True)
        return (y - mu) * jax.lax.rsqrt(var + 1e-5) * g_ref[...] + beta_ref[...]

    # ---- self-attention: fused QKV projection (one (E, 3E) matmul) ---------
    x = x_ref[0]                                        # (S, E) f32
    qkv = jnp.dot(x.astype(jnp.bfloat16), sa_wqkv[...],
                  preferred_element_type=jnp.float32) + sa_bqkv[...]
    x = mha_core(qkv[:, :e], qkv[:, e:2 * e], qkv[:, 2 * e:],
                 tmask_ref, sa_wo, sa_bo, sa_g, sa_beta)

    # ---- cross-attention: Q from x, fused K/V from memory ------------------
    q = jnp.dot(x.astype(jnp.bfloat16), ca_wq[...],
                preferred_element_type=jnp.float32) + ca_bq[...]
    kv = jnp.dot(mem_ref[0].astype(jnp.bfloat16), ca_wkv[...],
                 preferred_element_type=jnp.float32) + ca_bkv[...]
    x = mha_core(q, kv[:, :e], kv[:, e:],
                 smask_ref, ca_wo, ca_bo, ca_g, ca_beta)

    # ---- position-wise FFN: relu(x@W1+b1) @ W2 + b2 -------------------------
    # TODO(synk): dropout on the hidden activations skipped (eval mode).
    h = jnp.maximum(
        jnp.dot(x.astype(jnp.bfloat16), ff_w1[...],
                preferred_element_type=jnp.float32) + ff_b1[...], 0.0)
    o_ref[0] = (jnp.dot(h.astype(jnp.bfloat16), ff_w2[...],
                        preferred_element_type=jnp.float32) + ff_b2[...])


# ----------------------------------------------------------------------------
# Wrapper: pack/cast weights, build specs, single fused pallas_call
# ----------------------------------------------------------------------------
def decoder_layer(params, x, memory, source_mask, target_mask, *, num_heads):
    b, s, e = x.shape
    sm = memory.shape[1]
    d_k = e // num_heads
    sa, ca, ff = params["self_attn"], params["src_attn"], params["ff"]
    d_ff = ff["w1"].shape[1]

    bf = lambda w: w.astype(jnp.bfloat16)   # matmul operands in bf16 (f32 acc)
    # Pack Q/K/V projections into one wide matmul (self: E x 3E, cross KV: E x 2E).
    sa_wqkv = bf(jnp.concatenate([sa["w0"], sa["w1"], sa["w2"]], axis=1))
    sa_bqkv = jnp.concatenate([sa["b0"], sa["b1"], sa["b2"]]).reshape(1, 3 * e)
    sa_wo, sa_bo = bf(sa["w3"]), sa["b3"].reshape(1, e)
    sa_g, sa_beta = sa["ln_gamma"].reshape(1, e), sa["ln_beta"].reshape(1, e)

    ca_wq, ca_bq = bf(ca["w0"]), ca["b0"].reshape(1, e)
    ca_wkv = bf(jnp.concatenate([ca["w1"], ca["w2"]], axis=1))
    ca_bkv = jnp.concatenate([ca["b1"], ca["b2"]]).reshape(1, 2 * e)
    ca_wo, ca_bo = bf(ca["w3"]), ca["b3"].reshape(1, e)
    ca_g, ca_beta = ca["ln_gamma"].reshape(1, e), ca["ln_beta"].reshape(1, e)

    ff_w1, ff_b1 = bf(ff["w1"]), ff["b1"].reshape(1, d_ff)
    ff_w2, ff_b2 = bf(ff["w2"]), ff["b2"].reshape(1, e)

    args = [x, memory]
    in_specs = [pl.BlockSpec((1, s, e), lambda i: (i, 0, 0)),
                pl.BlockSpec((1, sm, e), lambda i: (i, 0, 0))]

    def add_mask(mask, sk):
        """None -> skipped statically; batch-invariant mask DMA'd once."""
        if mask is None:
            return False
        m = jnp.asarray(mask, jnp.float32)
        if m.ndim == 2:
            m = m[None]
        args.append(m)
        if m.shape[0] == 1:
            in_specs.append(pl.BlockSpec((1, s, sk), lambda i: (0, 0, 0)))
        else:
            in_specs.append(pl.BlockSpec((1, s, sk), lambda i: (i, 0, 0)))
        return True

    has_tmask = add_mask(target_mask, s)
    has_smask = add_mask(source_mask, sm)

    weight_args = [sa_wqkv, sa_bqkv, sa_wo, sa_bo, sa_g, sa_beta,
                   ca_wq, ca_bq, ca_wkv, ca_bkv, ca_wo, ca_bo, ca_g, ca_beta,
                   ff_w1, ff_b1, ff_w2, ff_b2]
    for wa in weight_args:
        # Weights resident across the batch grid axis (all 2-D).
        in_specs.append(pl.BlockSpec(wa.shape, lambda i: (0, 0)))

    kernel = functools.partial(
        _decoder_layer_kernel, num_heads=num_heads, d_k=d_k,
        has_tmask=has_tmask, has_smask=has_smask)

    out = pl.pallas_call(
        kernel,
        out_shape=jax.ShapeDtypeStruct((b, s, e), jnp.float32),
        grid=(b,),
        in_specs=in_specs,
        out_specs=pl.BlockSpec((1, s, e), lambda i: (i, 0, 0)),
        scratch_shapes=[pltpu.VMEM((s, e), jnp.float32)],  # concat-heads buffer
        compiler_params=pltpu.CompilerParams(
            dimension_semantics=("parallel",),
            vmem_limit_bytes=_vmem_limit_bytes()),
    )(*args, *weight_args)
    return out


# ----------------------------------------------------------------------------
# Parameter init (deterministic)
# ----------------------------------------------------------------------------
def init_mha_params(key, embedding_dim):
    keys = jax.random.split(key, 8)
    p = {}
    scale = 1.0 / math.sqrt(embedding_dim)
    for i in range(4):
        p[f"w{i}"] = jax.random.normal(
            keys[2 * i], (embedding_dim, embedding_dim), jnp.float32) * scale
        p[f"b{i}"] = jax.random.normal(
            keys[2 * i + 1], (embedding_dim,), jnp.float32) * 0.01
    p["ln_gamma"] = jnp.ones((embedding_dim,), jnp.float32)
    p["ln_beta"] = jnp.zeros((embedding_dim,), jnp.float32)
    return p


def init_ffn_params(key, embedding_dim, d_ff):
    k1, k2, k3, k4 = jax.random.split(key, 4)
    return {
        "w1": jax.random.normal(k1, (embedding_dim, d_ff), jnp.float32)
        / math.sqrt(embedding_dim),
        "b1": jax.random.normal(k2, (d_ff,), jnp.float32) * 0.01,
        "w2": jax.random.normal(k3, (d_ff, embedding_dim), jnp.float32)
        / math.sqrt(d_ff),
        "b2": jax.random.normal(k4, (embedding_dim,), jnp.float32) * 0.01,
    }


def init_decoder_params(key, embedding_dim, d_ff):
    k1, k2, k3 = jax.random.split(key, 3)
    return {
        "self_attn": init_mha_params(k1, embedding_dim),
        "src_attn": init_mha_params(k2, embedding_dim),
        "ff": init_ffn_params(k3, embedding_dim, d_ff),
    }


# ----------------------------------------------------------------------------
# Pure-JAX f32 reference (identical math, no bf16) for a sanity check
# ----------------------------------------------------------------------------
def _reference_mha(p, query, key, value, mask, *, num_heads):
    b, sq, e = query.shape
    sk = key.shape[1]
    d_k = e // num_heads
    q = (query.reshape(b * sq, e) @ p["w0"] + p["b0"]).reshape(
        b, sq, num_heads, d_k).transpose(0, 2, 1, 3)
    k = (key.reshape(b * sk, e) @ p["w1"] + p["b1"]).reshape(
        b, sk, num_heads, d_k).transpose(0, 2, 1, 3)
    v = (value.reshape(b * sk, e) @ p["w2"] + p["b2"]).reshape(
        b, sk, num_heads, d_k).transpose(0, 2, 1, 3)
    scores = jnp.einsum("bhqd,bhkd->bhqk", q, k) / math.sqrt(d_k)
    if mask is not None:
        m = mask if mask.ndim == 3 else mask[None]
        scores = jnp.where(m[:, None, :, :] == 0, 1e-9, scores)
    p_attn = jax.nn.softmax(scores, axis=-1)
    x = jnp.einsum("bhqk,bhkd->bhqd", p_attn, v)
    x = x.transpose(0, 2, 1, 3).reshape(b * sq, e)
    y = x + (x @ p["w3"] + p["b3"])
    mu = y.mean(-1, keepdims=True)
    var = ((y - mu) ** 2).mean(-1, keepdims=True)
    out = (y - mu) / jnp.sqrt(var + 1e-5) * p["ln_gamma"] + p["ln_beta"]
    return out.reshape(b, sq, e)


def _reference_decoder(params, x, memory, source_mask, target_mask, *, num_heads):
    x = _reference_mha(params["self_attn"], x, x, x, target_mask,
                       num_heads=num_heads)
    x = _reference_mha(params["src_attn"], x, memory, memory, source_mask,
                       num_heads=num_heads)
    b, s, e = x.shape
    h = jnp.maximum(x.reshape(b * s, e) @ params["ff"]["w1"]
                    + params["ff"]["b1"], 0.0)
    out = h @ params["ff"]["w2"] + params["ff"]["b2"]
    return out.reshape(b, s, e)


if __name__ == "__main__":
    B, S, HEAD, EMB, D_FF = 2, 8, 4, 32, 128

    root = jax.random.PRNGKey(0)
    k_param, k_x, k_mem = jax.random.split(root, 3)

    params = init_decoder_params(k_param, EMB, D_FF)
    x = jax.random.normal(k_x, (B, S, EMB), jnp.float32)
    memory = jax.random.normal(k_mem, (B, S, EMB), jnp.float32)
    target_mask = jnp.tril(jnp.ones((S, S), jnp.float32))  # shared causal mask
    source_mask = None  # all-ones mask == no masking -> skipped statically

    fwd = jax.jit(functools.partial(decoder_layer, num_heads=HEAD))
    out = jax.block_until_ready(fwd(params, x, memory, source_mask, target_mask))

    assert out.shape == (B, S, EMB) and out.dtype == jnp.float32

    ref = _reference_decoder(params, x, memory, source_mask, target_mask,
                             num_heads=HEAD)
    # bf16 matmul operands (f32 accumulation) trade a small numeric delta
    # vs the pure-f32 reference for ~2x MXU throughput.
    max_err = float(jnp.max(jnp.abs(out - ref)))
    assert max_err < 2e-1, f"mismatch vs reference: max abs err {max_err}"

    print("KERNEL_OK")
</pallas_src>

<mosaic_0001>
module attributes {stable_mosaic.version = 11 : i64} {
  func.func @_decoder_layer_kernel(%arg0: i32, %arg1: memref<1x8x32xf32, #tpu.memory_space<vmem>>, %arg2: memref<1x8x32xf32, #tpu.memory_space<vmem>>, %arg3: memref<1x8x8xf32, #tpu.memory_space<vmem>>, %arg4: memref<32x96xbf16, #tpu.memory_space<vmem>>, %arg5: memref<1x96xf32, #tpu.memory_space<vmem>>, %arg6: memref<32x32xbf16, #tpu.memory_space<vmem>>, %arg7: memref<1x32xf32, #tpu.memory_space<vmem>>, %arg8: memref<1x32xf32, #tpu.memory_space<vmem>>, %arg9: memref<1x32xf32, #tpu.memory_space<vmem>>, %arg10: memref<32x32xbf16, #tpu.memory_space<vmem>>, %arg11: memref<1x32xf32, #tpu.memory_space<vmem>>, %arg12: memref<32x64xbf16, #tpu.memory_space<vmem>>, %arg13: memref<1x64xf32, #tpu.memory_space<vmem>>, %arg14: memref<32x32xbf16, #tpu.memory_space<vmem>>, %arg15: memref<1x32xf32, #tpu.memory_space<vmem>>, %arg16: memref<1x32xf32, #tpu.memory_space<vmem>>, %arg17: memref<1x32xf32, #tpu.memory_space<vmem>>, %arg18: memref<32x128xbf16, #tpu.memory_space<vmem>>, %arg19: memref<1x128xf32, #tpu.memory_space<vmem>>, %arg20: memref<128x32xbf16, #tpu.memory_space<vmem>>, %arg21: memref<1x32xf32, #tpu.memory_space<vmem>>, %arg22: memref<1x8x32xf32, #tpu.memory_space<vmem>>, %arg23: memref<8x32xf32, #tpu.memory_space<vmem>>) attributes {dimension_semantics = [#tpu.dimension_semantics<parallel>], iteration_bounds = array<i64: 2>, scalar_prefetch = 0 : i64, scratch_operands = 1 : i64, tpu.core_type = #tpu.core_type<tc>, window_params = [{transform_indices = @transform_0, window_bounds = array<i64: 1, 8, 32>}, {transform_indices = @transform_1, window_bounds = array<i64: 1, 8, 32>}, {pipeline_mode = #tpu.pipeline_mode<synchronous>, transform_indices = @transform_2, window_bounds = array<i64: 1, 8, 8>}, {pipeline_mode = #tpu.pipeline_mode<synchronous>, transform_indices = @transform_3, window_bounds = array<i64: 32, 96>}, {pipeline_mode = #tpu.pipeline_mode<synchronous>, transform_indices = @transform_4, window_bounds = array<i64: 1, 96>}, {pipeline_mode = #tpu.pipeline_mode<synchronous>, transform_indices = @transform_5, window_bounds = array<i64: 32, 32>}, {pipeline_mode = #tpu.pipeline_mode<synchronous>, transform_indices = @transform_6, window_bounds = array<i64: 1, 32>}, {pipeline_mode = #tpu.pipeline_mode<synchronous>, transform_indices = @transform_7, window_bounds = array<i64: 1, 32>}, {pipeline_mode = #tpu.pipeline_mode<synchronous>, transform_indices = @transform_8, window_bounds = array<i64: 1, 32>}, {pipeline_mode = #tpu.pipeline_mode<synchronous>, transform_indices = @transform_9, window_bounds = array<i64: 32, 32>}, {pipeline_mode = #tpu.pipeline_mode<synchronous>, transform_indices = @transform_10, window_bounds = array<i64: 1, 32>}, {pipeline_mode = #tpu.pipeline_mode<synchronous>, transform_indices = @transform_11, window_bounds = array<i64: 32, 64>}, {pipeline_mode = #tpu.pipeline_mode<synchronous>, transform_indices = @transform_12, window_bounds = array<i64: 1, 64>}, {pipeline_mode = #tpu.pipeline_mode<synchronous>, transform_indices = @transform_13, window_bounds = array<i64: 32, 32>}, {pipeline_mode = #tpu.pipeline_mode<synchronous>, transform_indices = @transform_14, window_bounds = array<i64: 1, 32>}, {pipeline_mode = #tpu.pipeline_mode<synchronous>, transform_indices = @transform_15, window_bounds = array<i64: 1, 32>}, {pipeline_mode = #tpu.pipeline_mode<synchronous>, transform_indices = @transform_16, window_bounds = array<i64: 1, 32>}, {pipeline_mode = #tpu.pipeline_mode<synchronous>, transform_indices = @transform_17, window_bounds = array<i64: 32, 128>}, {pipeline_mode = #tpu.pipeline_mode<synchronous>, transform_indices = @transform_18, window_bounds = array<i64: 1, 128>}, {pipeline_mode = #tpu.pipeline_mode<synchronous>, transform_indices = @transform_19, window_bounds = array<i64: 128, 32>}, {pipeline_mode = #tpu.pipeline_mode<synchronous>, transform_indices = @transform_20, window_bounds = array<i64: 1, 32>}, {transform_indices = @transform_21, window_bounds = array<i64: 1, 8, 32>}]} {
    %c0 = arith.constant 0 : index
    %c0_0 = arith.constant 0 : index
    %c0_1 = arith.constant 0 : index
    %0 = vector.load %arg1[%c0, %c0_0, %c0_1] : memref<1x8x32xf32, #tpu.memory_space<vmem>>, vector<1x8x32xf32>
    %1 = vector.shape_cast %0 : vector<1x8x32xf32> to vector<8x32xf32>
    %2 = arith.truncf %1 : vector<8x32xf32> to vector<8x32xbf16>
    %c0_2 = arith.constant 0 : index
    %c0_3 = arith.constant 0 : index
    %3 = vector.load %arg4[%c0_2, %c0_3] : memref<32x96xbf16, #tpu.memory_space<vmem>>, vector<32x96xbf16>
    %cst = arith.constant dense<0.000000e+00> : vector<8x96xf32>
    %4 = tpu.matmul %2, %3, %cst {dimension_numbers = #tpu.dot_dimension_numbers<[1], [0], [0], [1], [0, 0, 1, 1], [], []>} : vector<8x32xbf16>, vector<32x96xbf16>, vector<8x96xf32> -> vector<8x96xf32>
    %c0_4 = arith.constant 0 : index
    %c0_5 = arith.constant 0 : index
    %5 = vector.load %arg5[%c0_4, %c0_5] : memref<1x96xf32, #tpu.memory_space<vmem>>, vector<1x96xf32>
    %6 = vector.broadcast %5 : vector<1x96xf32> to vector<8x96xf32>
    %7 = arith.addf %4, %6 : vector<8x96xf32>
    %8 = vector.extract_strided_slice %7 {offsets = [0, 0], sizes = [8, 32], strides = [1, 1]} : vector<8x96xf32> to vector<8x32xf32>
    %9 = vector.extract_strided_slice %7 {offsets = [0, 32], sizes = [8, 32], strides = [1, 1]} : vector<8x96xf32> to vector<8x32xf32>
    %10 = vector.extract_strided_slice %7 {offsets = [0, 64], sizes = [8, 32], strides = [1, 1]} : vector<8x96xf32> to vector<8x32xf32>
    %cst_6 = arith.constant 0.353553385 : f32
    %11 = vector.broadcast %cst_6 : f32 to vector<8x32xf32>
    %12 = arith.mulf %8, %11 : vector<8x32xf32>
    %13 = arith.truncf %12 : vector<8x32xf32> to vector<8x32xbf16>
    %14 = arith.truncf %9 : vector<8x32xf32> to vector<8x32xbf16>
    %15 = arith.truncf %10 : vector<8x32xf32> to vector<8x32xbf16>
    %c0_7 = arith.constant 0 : index
    %c0_8 = arith.constant 0 : index
    %c0_9 = arith.constant 0 : index
    %16 = vector.load %arg3[%c0_7, %c0_8, %c0_9] : memref<1x8x8xf32, #tpu.memory_space<vmem>>, vector<1x8x8xf32>
    %17 = vector.shape_cast %16 : vector<1x8x8xf32> to vector<8x8xf32>
    %cst_10 = arith.constant 0.000000e+00 : f32
    %18 = vector.broadcast %cst_10 : f32 to vector<8x8xf32>
    %19 = arith.cmpf oeq, %17, %18 : vector<8x8xf32>
    %20 = vector.extract_strided_slice %13 {offsets = [0, 0], sizes = [8, 8], strides = [1, 1]} : vector<8x32xbf16> to vector<8x8xbf16>
    %21 = vector.extract_strided_slice %14 {offsets = [0, 0], sizes = [8, 8], strides = [1, 1]} : vector<8x32xbf16> to vector<8x8xbf16>
    %cst_11 = arith.constant dense<0.000000e+00> : vector<8x8xf32>
    %22 = tpu.matmul %20, %21, %cst_11 {dimension_numbers = #tpu.dot_dimension_numbers<[1], [1], [0], [0], [0, 0, 1, 0], [], []>} : vector<8x8xbf16>, vector<8x8xbf16>, vector<8x8xf32> -> vector<8x8xf32>
    %cst_12 = arith.constant 9.99999971E-10 : f32
    %23 = vector.broadcast %cst_12 : f32 to vector<8x8xf32>
    %24 = arith.select %19, %23, %22 : vector<8x8xi1>, vector<8x8xf32>
    %cst_13 = arith.constant dense<0xFF800000> : vector<8xf32>
    %25 = vector.multi_reduction <maximumf>, %24, %cst_13 [1] : vector<8x8xf32> to vector<8xf32>
    %26 = vector.shape_cast %25 : vector<8xf32> to vector<8x1xf32>
    %27 = vector.broadcast %26 : vector<8x1xf32> to vector<8x8xf32>
    %28 = arith.subf %24, %27 : vector<8x8xf32>
    %29 = math.exp %28 : vector<8x8xf32>
    %cst_14 = arith.constant dense<0.000000e+00> : vector<8xf32>
    %30 = vector.multi_reduction <add>, %29, %cst_14 [1] : vector<8x8xf32> to vector<8xf32>
    %31 = vector.shape_cast %30 : vector<8xf32> to vector<8x1xf32>
    %32 = tpu.reciprocal %31 {approx = true} : vector<8x1xf32> -> vector<8x1xf32>
    %33 = vector.broadcast %32 : vector<8x1xf32> to vector<8x8xf32>
    %34 = arith.mulf %29, %33 : vector<8x8xf32>
    %35 = arith.truncf %34 : vector<8x8xf32> to vector<8x8xbf16>
    %36 = vector.extract_strided_slice %15 {offsets = [0, 0], sizes = [8, 8], strides = [1, 1]} : vector<8x32xbf16> to vector<8x8xbf16>
    %cst_15 = arith.constant dense<0.000000e+00> : vector<8x8xf32>
    %37 = tpu.matmul %35, %36, %cst_15 {dimension_numbers = #tpu.dot_dimension_numbers<[1], [0], [0], [1], [0, 0, 1, 1], [], []>} : vector<8x8xbf16>, vector<8x8xbf16>, vector<8x8xf32> -> vector<8x8xf32>
    %c0_16 = arith.constant 0 : index
    %c0_17 = arith.constant 0 : index
    %38 = vector.load %arg23[%c0_16, %c0_17] : memref<8x32xf32, #tpu.memory_space<vmem>>, vector<8x8xf32>
    tpu.vector_store %arg23[%c0_16, %c0_17], %37 {strides = array<i32>} : memref<8x32xf32, #tpu.memory_space<vmem>>, vector<8x8xf32>,
    %39 = vector.extract_strided_slice %13 {offsets = [0, 8], sizes = [8, 8], strides = [1, 1]} : vector<8x32xbf16> to vector<8x8xbf16>
    %40 = vector.extract_strided_slice %14 {offsets = [0, 8], sizes = [8, 8], strides = [1, 1]} : vector<8x32xbf16> to vector<8x8xbf16>
    %cst_18 = arith.constant dense<0.000000e+00> : vector<8x8xf32>
    %41 = tpu.matmul %39, %40, %cst_18 {dimension_numbers = #tpu.dot_dimension_numbers<[1], [1], [0], [0], [0, 0, 1, 0], [], []>} : vector<8x8xbf16>, vector<8x8xbf16>, vector<8x8xf32> -> vector<8x8xf32>
    %cst_19 = arith.constant 9.99999971E-10 : f32
    %42 = vector.broadcast %cst_19 : f32 to vector<8x8xf32>
    %43 = arith.select %19, %42, %41 : vector<8x8xi1>, vector<8x8xf32>
    %cst_20 = arith.constant dense<0xFF800000> : vector<8xf32>
    %44 = vector.multi_reduction <maximumf>, %43, %cst_20 [1] : vector<8x8xf32> to vector<8xf32>
    %45 = vector.shape_cast %44 : vector<8xf32> to vector<8x1xf32>
    %46 = vector.broadcast %45 : vector<8x1xf32> to vector<8x8xf32>
    %47 = arith.subf %43, %46 : vector<8x8xf32>
    %48 = math.exp %47 : vector<8x8xf32>
    %cst_21 = arith.constant dense<0.000000e+00> : vector<8xf32>
    %49 = vector.multi_reduction <add>, %48, %cst_21 [1] : vector<8x8xf32> to vector<8xf32>
    %50 = vector.shape_cast %49 : vector<8xf32> to vector<8x1xf32>
    %51 = tpu.reciprocal %50 {approx = true} : vector<8x1xf32> -> vector<8x1xf32>
    %52 = vector.broadcast %51 : vector<8x1xf32> to vector<8x8xf32>
    %53 = arith.mulf %48, %52 : vector<8x8xf32>
    %54 = arith.truncf %53 : vector<8x8xf32> to vector<8x8xbf16>
    %55 = vector.extract_strided_slice %15 {offsets = [0, 8], sizes = [8, 8], strides = [1, 1]} : vector<8x32xbf16> to vector<8x8xbf16>
    %cst_22 = arith.constant dense<0.000000e+00> : vector<8x8xf32>
    %56 = tpu.matmul %54, %55, %cst_22 {dimension_numbers = #tpu.dot_dimension_numbers<[1], [0], [0], [1], [0, 0, 1, 1], [], []>} : vector<8x8xbf16>, vector<8x8xbf16>, vector<8x8xf32> -> vector<8x8xf32>
    %c0_23 = arith.constant 0 : index
    %c8 = arith.constant 8 : index
    %57 = vector.load %arg23[%c0_23, %c8] : memref<8x32xf32, #tpu.memory_space<vmem>>, vector<8x8xf32>
    tpu.vector_store %arg23[%c0_23, %c8], %56 {strides = array<i32>} : memref<8x32xf32, #tpu.memory_space<vmem>>, vector<8x8xf32>,
    %58 = vector.extract_strided_slice %13 {offsets = [0, 16], sizes = [8, 8], strides = [1, 1]} : vector<8x32xbf16> to vector<8x8xbf16>
    %59 = vector.extract_strided_slice %14 {offsets = [0, 16], sizes = [8, 8], strides = [1, 1]} : vector<8x32xbf16> to vector<8x8xbf16>
    %cst_24 = arith.constant dense<0.000000e+00> : vector<8x8xf32>
    %60 = tpu.matmul %58, %59, %cst_24 {dimension_numbers = #tpu.dot_dimension_numbers<[1], [1], [0], [0], [0, 0, 1, 0], [], []>} : vector<8x8xbf16>, vector<8x8xbf16>, vector<8x8xf32> -> vector<8x8xf32>
    %cst_25 = arith.constant 9.99999971E-10 : f32
    %61 = vector.broadcast %cst_25 : f32 to vector<8x8xf32>
    %62 = arith.select %19, %61, %60 : vector<8x8xi1>, vector<8x8xf32>
    %cst_26 = arith.constant dense<0xFF800000> : vector<8xf32>
    %63 = vector.multi_reduction <maximumf>, %62, %cst_26 [1] : vector<8x8xf32> to vector<8xf32>
    %64 = vector.shape_cast %63 : vector<8xf32> to vector<8x1xf32>
    %65 = vector.broadcast %64 : vector<8x1xf32> to vector<8x8xf32>
    %66 = arith.subf %62, %65 : vector<8x8xf32>
    %67 = math.exp %66 : vector<8x8xf32>
    %cst_27 = arith.constant dense<0.000000e+00> : vector<8xf32>
    %68 = vector.multi_reduction <add>, %67, %cst_27 [1] : vector<8x8xf32> to vector<8xf32>
    %69 = vector.shape_cast %68 : vector<8xf32> to vector<8x1xf32>
    %70 = tpu.reciprocal %69 {approx = true} : vector<8x1xf32> -> vector<8x1xf32>
    %71 = vector.broadcast %70 : vector<8x1xf32> to vector<8x8xf32>
    %72 = arith.mulf %67, %71 : vector<8x8xf32>
    %73 = arith.truncf %72 : vector<8x8xf32> to vector<8x8xbf16>
    %74 = vector.extract_strided_slice %15 {offsets = [0, 16], sizes = [8, 8], strides = [1, 1]} : vector<8x32xbf16> to vector<8x8xbf16>
    %cst_28 = arith.constant dense<0.000000e+00> : vector<8x8xf32>
    %75 = tpu.matmul %73, %74, %cst_28 {dimension_numbers = #tpu.dot_dimension_numbers<[1], [0], [0], [1], [0, 0, 1, 1], [], []>} : vector<8x8xbf16>, vector<8x8xbf16>, vector<8x8xf32> -> vector<8x8xf32>
    %c0_29 = arith.constant 0 : index
    %c16 = arith.constant 16 : index
    %76 = vector.load %arg23[%c0_29, %c16] : memref<8x32xf32, #tpu.memory_space<vmem>>, vector<8x8xf32>
    tpu.vector_store %arg23[%c0_29, %c16], %75 {strides = array<i32>} : memref<8x32xf32, #tpu.memory_space<vmem>>, vector<8x8xf32>,
    %77 = vector.extract_strided_slice %13 {offsets = [0, 24], sizes = [8, 8], strides = [1, 1]} : vector<8x32xbf16> to vector<8x8xbf16>
    %78 = vector.extract_strided_slice %14 {offsets = [0, 24], sizes = [8, 8], strides = [1, 1]} : vector<8x32xbf16> to vector<8x8xbf16>
    %cst_30 = arith.constant dense<0.000000e+00> : vector<8x8xf32>
    %79 = tpu.matmul %77, %78, %cst_30 {dimension_numbers = #tpu.dot_dimension_numbers<[1], [1], [0], [0], [0, 0, 1, 0], [], []>} : vector<8x8xbf16>, vector<8x8xbf16>, vector<8x8xf32> -> vector<8x8xf32>
    %cst_31 = arith.constant 9.99999971E-10 : f32
    %80 = vector.broadcast %cst_31 : f32 to vector<8x8xf32>
    %81 = arith.select %19, %80, %79 : vector<8x8xi1>, vector<8x8xf32>
    %cst_32 = arith.constant dense<0xFF800000> : vector<8xf32>
    %82 = vector.multi_reduction <maximumf>, %81, %cst_32 [1] : vector<8x8xf32> to vector<8xf32>
    %83 = vector.shape_cast %82 : vector<8xf32> to vector<8x1xf32>
    %84 = vector.broadcast %83 : vector<8x1xf32> to vector<8x8xf32>
    %85 = arith.subf %81, %84 : vector<8x8xf32>
    %86 = math.exp %85 : vector<8x8xf32>
    %cst_33 = arith.constant dense<0.000000e+00> : vector<8xf32>
    %87 = vector.multi_reduction <add>, %86, %cst_33 [1] : vector<8x8xf32> to vector<8xf32>
    %88 = vector.shape_cast %87 : vector<8xf32> to vector<8x1xf32>
    %89 = tpu.reciprocal %88 {approx = true} : vector<8x1xf32> -> vector<8x1xf32>
    %90 = vector.broadcast %89 : vector<8x1xf32> to vector<8x8xf32>
    %91 = arith.mulf %86, %90 : vector<8x8xf32>
    %92 = arith.truncf %91 : vector<8x8xf32> to vector<8x8xbf16>
    %93 = vector.extract_strided_slice %15 {offsets = [0, 24], sizes = [8, 8], strides = [1, 1]} : vector<8x32xbf16> to vector<8x8xbf16>
    %cst_34 = arith.constant dense<0.000000e+00> : vector<8x8xf32>
    %94 = tpu.matmul %92, %93, %cst_34 {dimension_numbers = #tpu.dot_dimension_numbers<[1], [0], [0], [1], [0, 0, 1, 1], [], []>} : vector<8x8xbf16>, vector<8x8xbf16>, vector<8x8xf32> -> vector<8x8xf32>
    %c0_35 = arith.constant 0 : index
    %c24 = arith.constant 24 : index
    %95 = vector.load %arg23[%c0_35, %c24] : memref<8x32xf32, #tpu.memory_space<vmem>>, vector<8x8xf32>
    tpu.vector_store %arg23[%c0_35, %c24], %94 {strides = array<i32>} : memref<8x32xf32, #tpu.memory_space<vmem>>, vector<8x8xf32>,
    %c0_36 = arith.constant 0 : index
    %c0_37 = arith.constant 0 : index
    %96 = vector.load %arg23[%c0_36, %c0_37] : memref<8x32xf32, #tpu.memory_space<vmem>>, vector<8x32xf32>
    %97 = arith.truncf %96 : vector<8x32xf32> to vector<8x32xbf16>
    %c0_38 = arith.constant 0 : index
    %c0_39 = arith.constant 0 : index
    %98 = vector.load %arg6[%c0_38, %c0_39] : memref<32x32xbf16, #tpu.memory_space<vmem>>, vector<32x32xbf16>
    %cst_40 = arith.constant dense<0.000000e+00> : vector<8x32xf32>
    %99 = tpu.matmul %97, %98, %cst_40 {dimension_numbers = #tpu.dot_dimension_numbers<[1], [0], [0], [1], [0, 0, 1, 1], [], []>} : vector<8x32xbf16>, vector<32x32xbf16>, vector<8x32xf32> -> vector<8x32xf32>
    %c0_41 = arith.constant 0 : index
    %c0_42 = arith.constant 0 : index
    %100 = vector.load %arg7[%c0_41, %c0_42] : memref<1x32xf32, #tpu.memory_space<vmem>>, vector<1x32xf32>
    %101 = vector.broadcast %100 : vector<1x32xf32> to vector<8x32xf32>
    %102 = arith.addf %99, %101 : vector<8x32xf32>
    %103 = arith.addf %96, %102 : vector<8x32xf32>
    %cst_43 = arith.constant dense<0.000000e+00> : vector<8xf32>
    %104 = vector.multi_reduction <add>, %103, %cst_43 [1] : vector<8x32xf32> to vector<8xf32>
    %105 = vector.shape_cast %104 : vector<8xf32> to vector<8x1xf32>
    %cst_44 = arith.constant 3.200000e+01 : f32
    %106 = vector.broadcast %cst_44 : f32 to vector<8x1xf32>
    %107 = arith.divf %105, %106 : vector<8x1xf32>
    %108 = vector.broadcast %107 : vector<8x1xf32> to vector<8x32xf32>
    %109 = arith.subf %103, %108 : vector<8x32xf32>
    %110 = arith.mulf %109, %109 : vector<8x32xf32>
    %cst_45 = arith.constant dense<0.000000e+00> : vector<8xf32>
    %111 = vector.multi_reduction <add>, %110, %cst_45 [1] : vector<8x32xf32> to vector<8xf32>
    %112 = vector.shape_cast %111 : vector<8xf32> to vector<8x1xf32>
    %cst_46 = arith.constant 3.200000e+01 : f32
    %113 = vector.broadcast %cst_46 : f32 to vector<8x1xf32>
    %114 = arith.divf %112, %113 : vector<8x1xf32>
    %115 = vector.broadcast %107 : vector<8x1xf32> to vector<8x32xf32>
    %116 = arith.subf %103, %115 : vector<8x32xf32>
    %cst_47 = arith.constant 9.99999974E-6 : f32
    %117 = vector.broadcast %cst_47 : f32 to vector<8x1xf32>
    %118 = arith.addf %114, %117 : vector<8x1xf32>
    %119 = math.rsqrt %118 : vector<8x1xf32>
    %120 = vector.broadcast %119 : vector<8x1xf32> to vector<8x32xf32>
    %121 = arith.mulf %116, %120 : vector<8x32xf32>
    %c0_48 = arith.constant 0 : index
    %c0_49 = arith.constant 0 : index
    %122 = vector.load %arg8[%c0_48, %c0_49] : memref<1x32xf32, #tpu.memory_space<vmem>>, vector<1x32xf32>
    %123 = vector.broadcast %122 : vector<1x32xf32> to vector<8x32xf32>
    %124 = arith.mulf %121, %123 : vector<8x32xf32>
    %c0_50 = arith.constant 0 : index
    %c0_51 = arith.constant 0 : index
    %125 = vector.load %arg9[%c0_50, %c0_51] : memref<1x32xf32, #tpu.memory_space<vmem>>, vector<1x32xf32>
    %126 = vector.broadcast %125 : vector<1x32xf32> to vector<8x32xf32>
    %127 = arith.addf %124, %126 : vector<8x32xf32>
    %128 = arith.truncf %127 : vector<8x32xf32> to vector<8x32xbf16>
    %c0_52 = arith.constant 0 : index
    %c0_53 = arith.constant 0 : index
    %129 = vector.load %arg10[%c0_52, %c0_53] : memref<32x32xbf16, #tpu.memory_space<vmem>>, vector<32x32xbf16>
    %cst_54 = arith.constant dense<0.000000e+00> : vector<8x32xf32>
    %130 = tpu.matmul %128, %129, %cst_54 {dimension_numbers = #tpu.dot_dimension_numbers<[1], [0], [0], [1], [0, 0, 1, 1], [], []>} : vector<8x32xbf16>, vector<32x32xbf16>, vector<8x32xf32> -> vector<8x32xf32>
    %c0_55 = arith.constant 0 : index
    %c0_56 = arith.constant 0 : index
    %131 = vector.load %arg11[%c0_55, %c0_56] : memref<1x32xf32, #tpu.memory_space<vmem>>, vector<1x32xf32>
    %132 = vector.broadcast %131 : vector<1x32xf32> to vector<8x32xf32>
    %133 = arith.addf %130, %132 : vector<8x32xf32>
    %c0_57 = arith.constant 0 : index
    %c0_58 = arith.constant 0 : index
    %c0_59 = arith.constant 0 : index
    %134 = vector.load %arg2[%c0_57, %c0_58, %c0_59] : memref<1x8x32xf32, #tpu.memory_space<vmem>>, vector<1x8x32xf32>
    %135 = vector.shape_cast %134 : vector<1x8x32xf32> to vector<8x32xf32>
    %136 = arith.truncf %135 : vector<8x32xf32> to vector<8x32xbf16>
    %c0_60 = arith.constant 0 : index
    %c0_61 = arith.constant 0 : index
    %137 = vector.load %arg12[%c0_60, %c0_61] : memref<32x64xbf16, #tpu.memory_space<vmem>>, vector<32x64xbf16>
    %cst_62 = arith.constant dense<0.000000e+00> : vector<8x64xf32>
    %138 = tpu.matmul %136, %137, %cst_62 {dimension_numbers = #tpu.dot_dimension_numbers<[1], [0], [0], [1], [0, 0, 1, 1], [], []>} : vector<8x32xbf16>, vector<32x64xbf16>, vector<8x64xf32> -> vector<8x64xf32>
    %c0_63 = arith.constant 0 : index
    %c0_64 = arith.constant 0 : index
    %139 = vector.load %arg13[%c0_63, %c0_64] : memref<1x64xf32, #tpu.memory_space<vmem>>, vector<1x64xf32>
    %140 = vector.broadcast %139 : vector<1x64xf32> to vector<8x64xf32>
    %141 = arith.addf %138, %140 : vector<8x64xf32>
    %142 = vector.extract_strided_slice %141 {offsets = [0, 0], sizes = [8, 32], strides = [1, 1]} : vector<8x64xf32> to vector<8x32xf32>
    %143 = vector.extract_strided_slice %141 {offsets = [0, 32], sizes = [8, 32], strides = [1, 1]} : vector<8x64xf32> to vector<8x32xf32>
    %cst_65 = arith.constant 0.353553385 : f32
    %144 = vector.broadcast %cst_65 : f32 to vector<8x32xf32>
    %145 = arith.mulf %133, %144 : vector<8x32xf32>
    %146 = arith.truncf %145 : vector<8x32xf32> to vector<8x32xbf16>
    %147 = arith.truncf %142 : vector<8x32xf32> to vector<8x32xbf16>
    %148 = arith.truncf %143 : vector<8x32xf32> to vector<8x32xbf16>
    %149 = vector.extract_strided_slice %146 {offsets = [0, 0], sizes = [8, 8], strides = [1, 1]} : vector<8x32xbf16> to vector<8x8xbf16>
    %150 = vector.extract_strided_slice %147 {offsets = [0, 0], sizes = [8, 8], strides = [1, 1]} : vector<8x32xbf16> to vector<8x8xbf16>
    %cst_66 = arith.constant dense<0.000000e+00> : vector<8x8xf32>
    %151 = tpu.matmul %149, %150, %cst_66 {dimension_numbers = #tpu.dot_dimension_numbers<[1], [1], [0], [0], [0, 0, 1, 0], [], []>} : vector<8x8xbf16>, vector<8x8xbf16>, vector<8x8xf32> -> vector<8x8xf32>
    %cst_67 = arith.constant dense<0xFF800000> : vector<8xf32>
    %152 = vector.multi_reduction <maximumf>, %151, %cst_67 [1] : vector<8x8xf32> to vector<8xf32>
    %153 = vector.shape_cast %152 : vector<8xf32> to vector<8x1xf32>
    %154 = vector.broadcast %153 : vector<8x1xf32> to vector<8x8xf32>
    %155 = arith.subf %151, %154 : vector<8x8xf32>
    %156 = math.exp %155 : vector<8x8xf32>
    %cst_68 = arith.constant dense<0.000000e+00> : vector<8xf32>
    %157 = vector.multi_reduction <add>, %156, %cst_68 [1] : vector<8x8xf32> to vector<8xf32>
    %158 = vector.shape_cast %157 : vector<8xf32> to vector<8x1xf32>
    %159 = tpu.reciprocal %158 {approx = true} : vector<8x1xf32> -> vector<8x1xf32>
    %160 = vector.broadcast %159 : vector<8x1xf32> to vector<8x8xf32>
    %161 = arith.mulf %156, %160 : vector<8x8xf32>
    %162 = arith.truncf %161 : vector<8x8xf32> to vector<8x8xbf16>
    %163 = vector.extract_strided_slice %148 {offsets = [0, 0], sizes = [8, 8], strides = [1, 1]} : vector<8x32xbf16> to vector<8x8xbf16>
    %cst_69 = arith.constant dense<0.000000e+00> : vector<8x8xf32>
    %164 = tpu.matmul %162, %163, %cst_69 {dimension_numbers = #tpu.dot_dimension_numbers<[1], [0], [0], [1], [0, 0, 1, 1], [], []>} : vector<8x8xbf16>, vector<8x8xbf16>, vector<8x8xf32> -> vector<8x8xf32>
    %c0_70 = arith.constant 0 : index
    %c0_71 = arith.constant 0 : index
    %165 = vector.load %arg23[%c0_70, %c0_71] : memref<8x32xf32, #tpu.memory_space<vmem>>, vector<8x8xf32>
    tpu.vector_store %arg23[%c0_70, %c0_71], %164 {strides = array<i32>} : memref<8x32xf32, #tpu.memory_space<vmem>>, vector<8x8xf32>,
    %166 = vector.extract_strided_slice %146 {offsets = [0, 8], sizes = [8, 8], strides = [1, 1]} : vector<8x32xbf16> to vector<8x8xbf16>
    %167 = vector.extract_strided_slice %147 {offsets = [0, 8], sizes = [8, 8], strides = [1, 1]} : vector<8x32xbf16> to vector<8x8xbf16>
    %cst_72 = arith.constant dense<0.000000e+00> : vector<8x8xf32>
    %168 = tpu.matmul %166, %167, %cst_72 {dimension_numbers = #tpu.dot_dimension_numbers<[1], [1], [0], [0], [0, 0, 1, 0], [], []>} : vector<8x8xbf16>, vector<8x8xbf16>, vector<8x8xf32> -> vector<8x8xf32>
    %cst_73 = arith.constant dense<0xFF800000> : vector<8xf32>
    %169 = vector.multi_reduction <maximumf>, %168, %cst_73 [1] : vector<8x8xf32> to vector<8xf32>
    %170 = vector.shape_cast %169 : vector<8xf32> to vector<8x1xf32>
    %171 = vector.broadcast %170 : vector<8x1xf32> to vector<8x8xf32>
    %172 = arith.subf %168, %171 : vector<8x8xf32>
    %173 = math.exp %172 : vector<8x8xf32>
    %cst_74 = arith.constant dense<0.000000e+00> : vector<8xf32>
    %174 = vector.multi_reduction <add>, %173, %cst_74 [1] : vector<8x8xf32> to vector<8xf32>
    %175 = vector.shape_cast %174 : vector<8xf32> to vector<8x1xf32>
    %176 = tpu.reciprocal %175 {approx = true} : vector<8x1xf32> -> vector<8x1xf32>
    %177 = vector.broadcast %176 : vector<8x1xf32> to vector<8x8xf32>
    %178 = arith.mulf %173, %177 : vector<8x8xf32>
    %179 = arith.truncf %178 : vector<8x8xf32> to vector<8x8xbf16>
    %180 = vector.extract_strided_slice %148 {offsets = [0, 8], sizes = [8, 8], strides = [1, 1]} : vector<8x32xbf16> to vector<8x8xbf16>
    %cst_75 = arith.constant dense<0.000000e+00> : vector<8x8xf32>
    %181 = tpu.matmul %179, %180, %cst_75 {dimension_numbers = #tpu.dot_dimension_numbers<[1], [0], [0], [1], [0, 0, 1, 1], [], []>} : vector<8x8xbf16>, vector<8x8xbf16>, vector<8x8xf32> -> vector<8x8xf32>
    %c0_76 = arith.constant 0 : index
    %c8_77 = arith.constant 8 : index
    %182 = vector.load %arg23[%c0_76, %c8_77] : memref<8x32xf32, #tpu.memory_space<vmem>>, vector<8x8xf32>
    tpu.vector_store %arg23[%c0_76, %c8_77], %181 {strides = array<i32>} : memref<8x32xf32, #tpu.memory_space<vmem>>, vector<8x8xf32>,
    %183 = vector.extract_strided_slice %146 {offsets = [0, 16], sizes = [8, 8], strides = [1, 1]} : vector<8x32xbf16> to vector<8x8xbf16>
    %184 = vector.extract_strided_slice %147 {offsets = [0, 16], sizes = [8, 8], strides = [1, 1]} : vector<8x32xbf16> to vector<8x8xbf16>
    %cst_78 = arith.constant dense<0.000000e+00> : vector<8x8xf32>
    %185 = tpu.matmul %183, %184, %cst_78 {dimension_numbers = #tpu.dot_dimension_numbers<[1], [1], [0], [0], [0, 0, 1, 0], [], []>} : vector<8x8xbf16>, vector<8x8xbf16>, vector<8x8xf32> -> vector<8x8xf32>
    %cst_79 = arith.constant dense<0xFF800000> : vector<8xf32>
    %186 = vector.multi_reduction <maximumf>, %185, %cst_79 [1] : vector<8x8xf32> to vector<8xf32>
    %187 = vector.shape_cast %186 : vector<8xf32> to vector<8x1xf32>
    %188 = vector.broadcast %187 : vector<8x1xf32> to vector<8x8xf32>
    %189 = arith.subf %185, %188 : vector<8x8xf32>
    %190 = math.exp %189 : vector<8x8xf32>
    %cst_80 = arith.constant dense<0.000000e+00> : vector<8xf32>
    %191 = vector.multi_reduction <add>, %190, %cst_80 [1] : vector<8x8xf32> to vector<8xf32>
    %192 = vector.shape_cast %191 : vector<8xf32> to vector<8x1xf32>
    %193 = tpu.reciprocal %192 {approx = true} : vector<8x1xf32> -> vector<8x1xf32>
    %194 = vector.broadcast %193 : vector<8x1xf32> to vector<8x8xf32>
    %195 = arith.mulf %190, %194 : vector<8x8xf32>
    %196 = arith.truncf %195 : vector<8x8xf32> to vector<8x8xbf16>
    %197 = vector.extract_strided_slice %148 {offsets = [0, 16], sizes = [8, 8], strides = [1, 1]} : vector<8x32xbf16> to vector<8x8xbf16>
    %cst_81 = arith.constant dense<0.000000e+00> : vector<8x8xf32>
    %198 = tpu.matmul %196, %197, %cst_81 {dimension_numbers = #tpu.dot_dimension_numbers<[1], [0], [0], [1], [0, 0, 1, 1], [], []>} : vector<8x8xbf16>, vector<8x8xbf16>, vector<8x8xf32> -> vector<8x8xf32>
    %c0_82 = arith.constant 0 : index
    %c16_83 = arith.constant 16 : index
    %199 = vector.load %arg23[%c0_82, %c16_83] : memref<8x32xf32, #tpu.memory_space<vmem>>, vector<8x8xf32>
    tpu.vector_store %arg23[%c0_82, %c16_83], %198 {strides = array<i32>} : memref<8x32xf32, #tpu.memory_space<vmem>>, vector<8x8xf32>,
    %200 = vector.extract_strided_slice %146 {offsets = [0, 24], sizes = [8, 8], strides = [1, 1]} : vector<8x32xbf16> to vector<8x8xbf16>
    %201 = vector.extract_strided_slice %147 {offsets = [0, 24], sizes = [8, 8], strides = [1, 1]} : vector<8x32xbf16> to vector<8x8xbf16>
    %cst_84 = arith.constant dense<0.000000e+00> : vector<8x8xf32>
    %202 = tpu.matmul %200, %201, %cst_84 {dimension_numbers = #tpu.dot_dimension_numbers<[1], [1], [0], [0], [0, 0, 1, 0], [], []>} : vector<8x8xbf16>, vector<8x8xbf16>, vector<8x8xf32> -> vector<8x8xf32>
    %cst_85 = arith.constant dense<0xFF800000> : vector<8xf32>
    %203 = vector.multi_reduction <maximumf>, %202, %cst_85 [1] : vector<8x8xf32> to vector<8xf32>
    %204 = vector.shape_cast %203 : vector<8xf32> to vector<8x1xf32>
    %205 = vector.broadcast %204 : vector<8x1xf32> to vector<8x8xf32>
    %206 = arith.subf %202, %205 : vector<8x8xf32>
    %207 = math.exp %206 : vector<8x8xf32>
    %cst_86 = arith.constant dense<0.000000e+00> : vector<8xf32>
    %208 = vector.multi_reduction <add>, %207, %cst_86 [1] : vector<8x8xf32> to vector<8xf32>
    %209 = vector.shape_cast %208 : vector<8xf32> to vector<8x1xf32>
    %210 = tpu.reciprocal %209 {approx = true} : vector<8x1xf32> -> vector<8x1xf32>
    %211 = vector.broadcast %210 : vector<8x1xf32> to vector<8x8xf32>
    %212 = arith.mulf %207, %211 : vector<8x8xf32>
    %213 = arith.truncf %212 : vector<8x8xf32> to vector<8x8xbf16>
    %214 = vector.extract_strided_slice %148 {offsets = [0, 24], sizes = [8, 8], strides = [1, 1]} : vector<8x32xbf16> to vector<8x8xbf16>
    %cst_87 = arith.constant dense<0.000000e+00> : vector<8x8xf32>
    %215 = tpu.matmul %213, %214, %cst_87 {dimension_numbers = #tpu.dot_dimension_numbers<[1], [0], [0], [1], [0, 0, 1, 1], [], []>} : vector<8x8xbf16>, vector<8x8xbf16>, vector<8x8xf32> -> vector<8x8xf32>
    %c0_88 = arith.constant 0 : index
    %c24_89 = arith.constant 24 : index
    %216 = vector.load %arg23[%c0_88, %c24_89] : memref<8x32xf32, #tpu.memory_space<vmem>>, vector<8x8xf32>
    tpu.vector_store %arg23[%c0_88, %c24_89], %215 {strides = array<i32>} : memref<8x32xf32, #tpu.memory_space<vmem>>, vector<8x8xf32>,
    %c0_90 = arith.constant 0 : index
    %c0_91 = arith.constant 0 : index
    %217 = vector.load %arg23[%c0_90, %c0_91] : memref<8x32xf32, #tpu.memory_space<vmem>>, vector<8x32xf32>
    %218 = arith.truncf %217 : vector<8x32xf32> to vector<8x32xbf16>
    %c0_92 = arith.constant 0 : index
    %c0_93 = arith.constant 0 : index
    %219 = vector.load %arg14[%c0_92, %c0_93] : memref<32x32xbf16, #tpu.memory_space<vmem>>, vector<32x32xbf16>
    %cst_94 = arith.constant dense<0.000000e+00> : vector<8x32xf32>
    %220 = tpu.matmul %218, %219, %cst_94 {dimension_numbers = #tpu.dot_dimension_numbers<[1], [0], [0], [1], [0, 0, 1, 1], [], []>} : vector<8x32xbf16>, vector<32x32xbf16>, vector<8x32xf32> -> vector<8x32xf32>
    %c0_95 = arith.constant 0 : index
    %c0_96 = arith.constant 0 : index
    %221 = vector.load %arg15[%c0_95, %c0_96] : memref<1x32xf32, #tpu.memory_space<vmem>>, vector<1x32xf32>
    %222 = vector.broadcast %221 : vector<1x32xf32> to vector<8x32xf32>
    %223 = arith.addf %220, %222 : vector<8x32xf32>
    %224 = arith.addf %217, %223 : vector<8x32xf32>
    %cst_97 = arith.constant dense<0.000000e+00> : vector<8xf32>
    %225 = vector.multi_reduction <add>, %224, %cst_97 [1] : vector<8x32xf32> to vector<8xf32>
    %226 = vector.shape_cast %225 : vector<8xf32> to vector<8x1xf32>
    %cst_98 = arith.constant 3.200000e+01 : f32
    %227 = vector.broadcast %cst_98 : f32 to vector<8x1xf32>
    %228 = arith.divf %226, %227 : vector<8x1xf32>
    %229 = vector.broadcast %228 : vector<8x1xf32> to vector<8x32xf32>
    %230 = arith.subf %224, %229 : vector<8x32xf32>
    %231 = arith.mulf %230, %230 : vector<8x32xf32>
    %cst_99 = arith.constant dense<0.000000e+00> : vector<8xf32>
    %232 = vector.multi_reduction <add>, %231, %cst_99 [1] : vector<8x32xf32> to vector<8xf32>
    %233 = vector.shape_cast %232 : vector<8xf32> to vector<8x1xf32>
    %cst_100 = arith.constant 3.200000e+01 : f32
    %234 = vector.broadcast %cst_100 : f32 to vector<8x1xf32>
    %235 = arith.divf %233, %234 : vector<8x1xf32>
    %236 = vector.broadcast %228 : vector<8x1xf32> to vector<8x32xf32>
    %237 = arith.subf %224, %236 : vector<8x32xf32>
    %cst_101 = arith.constant 9.99999974E-6 : f32
    %238 = vector.broadcast %cst_101 : f32 to vector<8x1xf32>
    %239 = arith.addf %235, %238 : vector<8x1xf32>
    %240 = math.rsqrt %239 : vector<8x1xf32>
    %241 = vector.broadcast %240 : vector<8x1xf32> to vector<8x32xf32>
    %242 = arith.mulf %237, %241 : vector<8x32xf32>
    %c0_102 = arith.constant 0 : index
    %c0_103 = arith.constant 0 : index
    %243 = vector.load %arg16[%c0_102, %c0_103] : memref<1x32xf32, #tpu.memory_space<vmem>>, vector<1x32xf32>
    %244 = vector.broadcast %243 : vector<1x32xf32> to vector<8x32xf32>
    %245 = arith.mulf %242, %244 : vector<8x32xf32>
    %c0_104 = arith.constant 0 : index
    %c0_105 = arith.constant 0 : index
    %246 = vector.load %arg17[%c0_104, %c0_105] : memref<1x32xf32, #tpu.memory_space<vmem>>, vector<1x32xf32>
    %247 = vector.broadcast %246 : vector<1x32xf32> to vector<8x32xf32>
    %248 = arith.addf %245, %247 : vector<8x32xf32>
    %249 = arith.truncf %248 : vector<8x32xf32> to vector<8x32xbf16>
    %c0_106 = arith.constant 0 : index
    %c0_107 = arith.constant 0 : index
    %250 = vector.load %arg18[%c0_106, %c0_107] : memref<32x128xbf16, #tpu.memory_space<vmem>>, vector<32x128xbf16>
    %cst_108 = arith.constant dense<0.000000e+00> : vector<8x128xf32>
    %251 = tpu.matmul %249, %250, %cst_108 {dimension_numbers = #tpu.dot_dimension_numbers<[1], [0], [0], [1], [0, 0, 1, 1], [], []>} : vector<8x32xbf16>, vector<32x128xbf16>, vector<8x128xf32> -> vector<8x128xf32>
    %c0_109 = arith.constant 0 : index
    %c0_110 = arith.constant 0 : index
    %252 = vector.load %arg19[%c0_109, %c0_110] : memref<1x128xf32, #tpu.memory_space<vmem>>, vector<1x128xf32>
    %253 = vector.broadcast %252 : vector<1x128xf32> to vector<8x128xf32>
    %254 = arith.addf %251, %253 : vector<8x128xf32>
    %cst_111 = arith.constant 0.000000e+00 : f32
    %255 = vector.broadcast %cst_111 : f32 to vector<8x128xf32>
    %256 = arith.maximumf %254, %255 : vector<8x128xf32>
    %257 = arith.truncf %256 : vector<8x128xf32> to vector<8x128xbf16>
    %c0_112 = arith.constant 0 : index
    %c0_113 = arith.constant 0 : index
    %258 = vector.load %arg20[%c0_112, %c0_113] : memref<128x32xbf16, #tpu.memory_space<vmem>>, vector<128x32xbf16>
    %cst_114 = arith.constant dense<0.000000e+00> : vector<8x32xf32>
    %259 = tpu.matmul %257, %258, %cst_114 {dimension_numbers = #tpu.dot_dimension_numbers<[1], [0], [0], [1], [0, 0, 1, 1], [], []>} : vector<8x128xbf16>, vector<128x32xbf16>, vector<8x32xf32> -> vector<8x32xf32>
    %c0_115 = arith.constant 0 : index
    %c0_116 = arith.constant 0 : index
    %260 = vector.load %arg21[%c0_115, %c0_116] : memref<1x32xf32, #tpu.memory_space<vmem>>, vector<1x32xf32>
    %261 = vector.broadcast %260 : vector<1x32xf32> to vector<8x32xf32>
    %262 = arith.addf %259, %261 : vector<8x32xf32>
    %c0_117 = arith.constant 0 : index
    %c0_118 = arith.constant 0 : index
    %c0_119 = arith.constant 0 : index
    %263 = vector.load %arg22[%c0_117, %c0_118, %c0_119] : memref<1x8x32xf32, #tpu.memory_space<vmem>>, vector<1x8x32xf32>
    %264 = vector.shape_cast %263 : vector<1x8x32xf32> to vector<8x32xf32>
    %265 = vector.shape_cast %262 : vector<8x32xf32> to vector<1x8x32xf32>
    tpu.vector_store %arg22[%c0_117, %c0_118, %c0_119], %265 {strides = array<i32>} : memref<1x8x32xf32, #tpu.memory_space<vmem>>, vector<1x8x32xf32>,
    return
  }
  func.func @transform_0(%arg0: i32) -> (i32, i32, i32) {
    %c0_i32 = arith.constant 0 : i32
    %c0_i32_0 = arith.constant 0 : i32
    %c0_i32_1 = arith.constant 0 : i32
    return %arg0, %c0_i32, %c0_i32_0 : i32, i32, i32
  }
  func.func @transform_1(%arg0: i32) -> (i32, i32, i32) {
    %c0_i32 = arith.constant 0 : i32
    %c0_i32_0 = arith.constant 0 : i32
    %c0_i32_1 = arith.constant 0 : i32
    return %arg0, %c0_i32, %c0_i32_0 : i32, i32, i32
  }
  func.func @transform_2(%arg0: i32) -> (i32, i32, i32) {
    %c0_i32 = arith.constant 0 : i32
    %c0_i32_0 = arith.constant 0 : i32
    %c0_i32_1 = arith.constant 0 : i32
    %c0_i32_2 = arith.constant 0 : i32
    return %c0_i32, %c0_i32_0, %c0_i32_1 : i32, i32, i32
  }
  func.func @transform_3(%arg0: i32) -> (i32, i32) {
    %c0_i32 = arith.constant 0 : i32
    %c0_i32_0 = arith.constant 0 : i32
    %c0_i32_1 = arith.constant 0 : i32
    return %c0_i32, %c0_i32_0 : i32, i32
  }
  func.func @transform_4(%arg0: i32) -> (i32, i32) {
    %c0_i32 = arith.constant 0 : i32
    %c0_i32_0 = arith.constant 0 : i32
    %c0_i32_1 = arith.constant 0 : i32
    return %c0_i32, %c0_i32_0 : i32, i32
  }
  func.func @transform_5(%arg0: i32) -> (i32, i32) {
    %c0_i32 = arith.constant 0 : i32
    %c0_i32_0 = arith.constant 0 : i32
    %c0_i32_1 = arith.constant 0 : i32
    return %c0_i32, %c0_i32_0 : i32, i32
  }
  func.func @transform_6(%arg0: i32) -> (i32, i32) {
    %c0_i32 = arith.constant 0 : i32
    %c0_i32_0 = arith.constant 0 : i32
    %c0_i32_1 = arith.constant 0 : i32
    return %c0_i32, %c0_i32_0 : i32, i32
  }
  func.func @transform_7(%arg0: i32) -> (i32, i32) {
    %c0_i32 = arith.constant 0 : i32
    %c0_i32_0 = arith.constant 0 : i32
    %c0_i32_1 = arith.constant 0 : i32
    return %c0_i32, %c0_i32_0 : i32, i32
  }
  func.func @transform_8(%arg0: i32) -> (i32, i32) {
    %c0_i32 = arith.constant 0 : i32
    %c0_i32_0 = arith.constant 0 : i32
    %c0_i32_1 = arith.constant 0 : i32
    return %c0_i32, %c0_i32_0 : i32, i32
  }
  func.func @transform_9(%arg0: i32) -> (i32, i32) {
    %c0_i32 = arith.constant 0 : i32
    %c0_i32_0 = arith.constant 0 : i32
    %c0_i32_1 = arith.constant 0 : i32
    return %c0_i32, %c0_i32_0 : i32, i32
  }
  func.func @transform_10(%arg0: i32) -> (i32, i32) {
    %c0_i32 = arith.constant 0 : i32
    %c0_i32_0 = arith.constant 0 : i32
    %c0_i32_1 = arith.constant 0 : i32
    return %c0_i32, %c0_i32_0 : i32, i32
  }
  func.func @transform_11(%arg0: i32) -> (i32, i32) {
    %c0_i32 = arith.constant 0 : i32
    %c0_i32_0 = arith.constant 0 : i32
    %c0_i32_1 = arith.constant 0 : i32
    return %c0_i32, %c0_i32_0 : i32, i32
  }
  func.func @transform_12(%arg0: i32) -> (i32, i32) {
    %c0_i32 = arith.constant 0 : i32
    %c0_i32_0 = arith.constant 0 : i32
    %c0_i32_1 = arith.constant 0 : i32
    return %c0_i32, %c0_i32_0 : i32, i32
  }
  func.func @transform_13(%arg0: i32) -> (i32, i32) {
    %c0_i32 = arith.constant 0 : i32
    %c0_i32_0 = arith.constant 0 : i32
    %c0_i32_1 = arith.constant 0 : i32
    return %c0_i32, %c0_i32_0 : i32, i32
  }
  func.func @transform_14(%arg0: i32) -> (i32, i32) {
    %c0_i32 = arith.constant 0 : i32
    %c0_i32_0 = arith.constant 0 : i32
    %c0_i32_1 = arith.constant 0 : i32
    return %c0_i32, %c0_i32_0 : i32, i32
  }
  func.func @transform_15(%arg0: i32) -> (i32, i32) {
    %c0_i32 = arith.constant 0 : i32
    %c0_i32_0 = arith.constant 0 : i32
    %c0_i32_1 = arith.constant 0 : i32
    return %c0_i32, %c0_i32_0 : i32, i32
  }
  func.func @transform_16(%arg0: i32) -> (i32, i32) {
    %c0_i32 = arith.constant 0 : i32
    %c0_i32_0 = arith.constant 0 : i32
    %c0_i32_1 = arith.constant 0 : i32
    return %c0_i32, %c0_i32_0 : i32, i32
  }
  func.func @transform_17(%arg0: i32) -> (i32, i32) {
    %c0_i32 = arith.constant 0 : i32
    %c0_i32_0 = arith.constant 0 : i32
    %c0_i32_1 = arith.constant 0 : i32
    return %c0_i32, %c0_i32_0 : i32, i32
  }
  func.func @transform_18(%arg0: i32) -> (i32, i32) {
    %c0_i32 = arith.constant 0 : i32
    %c0_i32_0 = arith.constant 0 : i32
    %c0_i32_1 = arith.constant 0 : i32
    return %c0_i32, %c0_i32_0 : i32, i32
  }
  func.func @transform_19(%arg0: i32) -> (i32, i32) {
    %c0_i32 = arith.constant 0 : i32
    %c0_i32_0 = arith.constant 0 : i32
    %c0_i32_1 = arith.constant 0 : i32
    return %c0_i32, %c0_i32_0 : i32, i32
  }
  func.func @transform_20(%arg0: i32) -> (i32, i32) {
    %c0_i32 = arith.constant 0 : i32
    %c0_i32_0 = arith.constant 0 : i32
    %c0_i32_1 = arith.constant 0 : i32
    return %c0_i32, %c0_i32_0 : i32, i32
  }
  func.func @transform_21(%arg0: i32) -> (i32, i32, i32) {
    %c0_i32 = arith.constant 0 : i32
    %c0_i32_0 = arith.constant 0 : i32
    %c0_i32_1 = arith.constant 0 : i32
    return %arg0, %c0_i32, %c0_i32_0 : i32, i32, i32
  }
}

</mosaic_0001>

<llo_original>
// kernel: decoder_layer.1
$region0: #{decoder_layer.1}
  #allocation0 [shape = 'u32[]', space=smem, size = 0x4, offset = 0x4, fixed_abs, tag = 'smem constant byte address 0x4 - core index']
  #allocation1 [shape = 'u32[144,128]{1,0:T(1,128)}', space=vmem, size = 0x12000, scoped, tag = 'internal scratch']
  #allocation2 [shape = 'f32[8,32]{1,0:T(8,128)}', space=vmem, size = 0x1000, scoped, tag = 'scratch operand']
  %s0 = inlined_call_operand.vmem [shape: f32[2,8,32], index: 0, kind: input, shape index: {}]
  %s1 = inlined_call_operand.vmem [shape: f32[2,8,32], index: 1, kind: input, shape index: {}]
  %s2 = inlined_call_operand.vmem [shape: f32[1,8,8], index: 2, kind: input, shape index: {}]
  %s3 = inlined_call_operand.vmem [shape: bf16[32,96], index: 3, kind: input, shape index: {}]
  %s4 = inlined_call_operand.vmem [shape: f32[1,96], index: 4, kind: input, shape index: {}]
  %s5 = inlined_call_operand.vmem [shape: bf16[32,32], index: 5, kind: input, shape index: {}]
  %s6 = inlined_call_operand.vmem [shape: f32[1,32], index: 6, kind: input, shape index: {}]
  %s7 = inlined_call_operand.vmem [shape: f32[1,32], index: 7, kind: input, shape index: {}]
  %s8 = inlined_call_operand.vmem [shape: f32[1,32], index: 8, kind: input, shape index: {}]
  %s9 = inlined_call_operand.vmem [shape: bf16[32,32], index: 9, kind: input, shape index: {}]
  %s10 = inlined_call_operand.vmem [shape: f32[1,32], index: 10, kind: input, shape index: {}]
  %s11 = inlined_call_operand.vmem [shape: bf16[32,64], index: 11, kind: input, shape index: {}]
  %s12 = inlined_call_operand.vmem [shape: f32[1,64], index: 12, kind: input, shape index: {}]
  %s13 = inlined_call_operand.vmem [shape: bf16[32,32], index: 13, kind: input, shape index: {}]
  %s14 = inlined_call_operand.vmem [shape: f32[1,32], index: 14, kind: input, shape index: {}]
  %s15 = inlined_call_operand.vmem [shape: f32[1,32], index: 15, kind: input, shape index: {}]
  %s16 = inlined_call_operand.vmem [shape: f32[1,32], index: 16, kind: input, shape index: {}]
  %s17 = inlined_call_operand.vmem [shape: bf16[32,128], index: 17, kind: input, shape index: {}]
  %s18 = inlined_call_operand.vmem [shape: f32[1,128], index: 18, kind: input, shape index: {}]
  %s19 = inlined_call_operand.vmem [shape: bf16[128,32], index: 19, kind: input, shape index: {}]
  %s20 = inlined_call_operand.vmem [shape: f32[1,32], index: 20, kind: input, shape index: {}]
  %s21 = inlined_call_operand.hbm [shape: f32[2,8,32], index: 21, kind: output, shape index: {}]
  %s22 = sld [smem:[#allocation0]]
  $region117: #{decoder_layer.1} parent=0
    _
  %s24 = ssub.s32 1, %s22
  %s25 = scalar_select 0, %s24, %s22
  $region1: #{decoder_layer.1} parent=0
    #allocation3 [shape = 'u8[8192]{0}', space=vmem, size = 0x2000, scoped, tag = 'output window, operand 0']
    #allocation4 [shape = 's32[2]{0}', space=sflag, size = 0x8, scoped, tag = 'scoped memory for decoder_layer.1']
    %26 = vsyncpa [#allocation4], 0
    %s27 = scalar_lea.sflag [#allocation4], 1
    %28 = vsyncpa %s27, 0
    loop: start=0, step=1, limit=4
    $region2: #{decoder_layer.1} parent=1 // loop_pre_header
      _
    $region3: #{decoder_layer.1} parent=1 // loop_header
      %s30 = sphi 0, %s34
      %p31 = scmp.ge.s32.totalorder %s30, 4
      %s40 = sphi 0, %s42
      %s43 = sphi 0, %s40
      %s44 = sphi 0, %s43
      %s60 = sphi 0, %s44
      %s66 = sphi 0, %s68
      %s69 = sphi 0, %s66
      %s70 = sphi 0, %s69
      %s86 = sphi 0, %s70
      %s90 = sphi 0, %s90
      %s92 = sphi 0, %s90
      %s93 = sphi 0, %s92
      %s107 = sphi 0, %s93
      %s111 = sphi 0, %s111
      %s113 = sphi 0, %s111
      %s114 = sphi 0, %s113
      %s128 = sphi 0, %s114
      %s132 = sphi 0, %s132
      %s134 = sphi 0, %s132
      %s135 = sphi 0, %s134
      %s149 = sphi 0, %s135
      %s153 = sphi 0, %s153
      %s155 = sphi 0, %s153
      %s156 = sphi 0, %s155
      %s170 = sphi 0, %s156
      %s174 = sphi 0, %s174
      %s176 = sphi 0, %s174
      %s177 = sphi 0, %s176
      %s191 = sphi 0, %s177
      %s195 = sphi 0, %s195
      %s197 = sphi 0, %s195
      %s198 = sphi 0, %s197
      %s212 = sphi 0, %s198
      %s216 = sphi 0, %s216
      %s218 = sphi 0, %s216
      %s219 = sphi 0, %s218
      %s233 = sphi 0, %s219
      %s237 = sphi 0, %s237
      %s239 = sphi 0, %s237
      %s240 = sphi 0, %s239
      %s254 = sphi 0, %s240
      %s258 = sphi 0, %s258
      %s260 = sphi 0, %s258
      %s261 = sphi 0, %s260
      %s275 = sphi 0, %s261
      %s279 = sphi 0, %s279
      %s281 = sphi 0, %s279
      %s282 = sphi 0, %s281
      %s296 = sphi 0, %s282
      %s300 = sphi 0, %s300
      %s302 = sphi 0, %s300
      %s303 = sphi 0, %s302
      %s317 = sphi 0, %s303
      %s321 = sphi 0, %s321
      %s323 = sphi 0, %s321
      %s324 = sphi 0, %s323
      %s338 = sphi 0, %s324
      %s342 = sphi 0, %s342
      %s344 = sphi 0, %s342
      %s345 = sphi 0, %s344
      %s359 = sphi 0, %s345
      %s363 = sphi 0, %s363
      %s365 = sphi 0, %s363
      %s366 = sphi 0, %s365
      %s380 = sphi 0, %s366
      %s384 = sphi 0, %s384
      %s386 = sphi 0, %s384
      %s387 = sphi 0, %s386
      %s401 = sphi 0, %s387
      %s405 = sphi 0, %s405
      %s407 = sphi 0, %s405
      %s408 = sphi 0, %s407
      %s422 = sphi 0, %s408
      %s426 = sphi 0, %s426
      %s428 = sphi 0, %s426
      %s429 = sphi 0, %s428
      %s443 = sphi 0, %s429
      %s447 = sphi 0, %s447
      %s449 = sphi 0, %s447
      %s450 = sphi 0, %s449
      %s464 = sphi 0, %s450
      %s468 = sphi 0, %s468
      %s470 = sphi 0, %s468
      %s471 = sphi 0, %s470
      %s485 = sphi 0, %s471
      %s491 = sphi 0, %s493
      %s494 = sphi 0, %s491
      %s495 = sphi 0, %s494
      %s511 = sphi 0, %s495
    $region4: #{decoder_layer.1} parent=1 // loop_header_branch
      %33 = sbr.rel (%p31) target = $region8
    $region5: #{decoder_layer.1} parent=1 // loop_body
      %s35 = ssub.s32 %s30, 1
      %s36 = ssub.s32 %s30, 2
      %s37 = sadd.s32 %s30, 1
      %s38 = ssub.s32 %s30, %s37
      %p39 = scmp.eq.s32.totalorder %s38, 0
      %s41 = sadd.s32 %s40, 1
      %s42 = scalar_select %p39, %s40, %s41
      %p45 = pneg %p39
      %p46 = scmp.eq.s32.totalorder %s30, 1
      %p47 = por %p45, %p46
      %p48 = scmp.ne.s32.totalorder %s40, %s43
      %p49 = scmp.eq.s32.totalorder %s30, 0
      %p50 = por %p48, %p49
      %p51 = scmp.ne.s32.totalorder %s40, %s43
      %p52 = scmp.eq.s32.totalorder %s35, 1
      %p53 = por %p51, %p52
      %p54 = scmp.ne.s32.totalorder %s43, %s44
      %p55 = scmp.eq.s32.totalorder %s35, 0
      %p56 = por %p54, %p55
      %p57 = scmp.ne.s32.totalorder %s43, %s44
      %p58 = scmp.eq.s32.totalorder %s36, 1
      %p59 = por %p57, %p58
      %p61 = scmp.ne.s32.totalorder %s44, %s60
      %p62 = scmp.eq.s32.totalorder %s36, 0
      %p63 = por %p61, %p62
      %s64 = ssub.s32 %s30, %s37
      %p65 = scmp.eq.s32.totalorder %s64, 0
      %s67 = sadd.s32 %s66, 1
      %s68 = scalar_select %p65, %s66, %s67
      %p71 = pneg %p65
      %p72 = scmp.eq.s32.totalorder %s30, 1
      %p73 = por %p71, %p72
      %p74 = scmp.ne.s32.totalorder %s66, %s69
      %p75 = scmp.eq.s32.totalorder %s30, 0
      %p76 = por %p74, %p75
      %p77 = scmp.ne.s32.totalorder %s66, %s69
      %p78 = scmp.eq.s32.totalorder %s35, 1
      %p79 = por %p77, %p78
      %p80 = scmp.ne.s32.totalorder %s69, %s70
      %p81 = scmp.eq.s32.totalorder %s35, 0
      %p82 = por %p80, %p81
      %p83 = scmp.ne.s32.totalorder %s69, %s70
      %p84 = scmp.eq.s32.totalorder %s36, 1
      %p85 = por %p83, %p84
      %p87 = scmp.ne.s32.totalorder %s70, %s86
      %p88 = scmp.eq.s32.totalorder %s36, 0
      %p89 = por %p87, %p88
      %s91 = sadd.s32 %s90, 1
      %p94 = scmp.eq.s32.totalorder %s30, 1
      %p95 = scmp.ne.s32.totalorder %s90, %s92
      %p96 = scmp.eq.s32.totalorder %s30, 0
      %p97 = por %p95, %p96
      %p98 = scmp.ne.s32.totalorder %s90, %s92
      %p99 = scmp.eq.s32.totalorder %s35, 1
      %p100 = por %p98, %p99
      %p101 = scmp.ne.s32.totalorder %s92, %s93
      %p102 = scmp.eq.s32.totalorder %s35, 0
      %p103 = por %p101, %p102
      %p104 = scmp.ne.s32.totalorder %s92, %s93
      %p105 = scmp.eq.s32.totalorder %s36, 1
      %p106 = por %p104, %p105
      %p108 = scmp.ne.s32.totalorder %s93, %s107
      %p109 = scmp.eq.s32.totalorder %s36, 0
      %p110 = por %p108, %p109
      %s112 = sadd.s32 %s111, 1
      %p115 = scmp.eq.s32.totalorder %s30, 1
      %p116 = scmp.ne.s32.totalorder %s111, %s113
      %p117 = scmp.eq.s32.totalorder %s30, 0
      %p118 = por %p116, %p117
      %p119 = scmp.ne.s32.totalorder %s111, %s113
      %p120 = scmp.eq.s32.totalorder %s35, 1
      %p121 = por %p119, %p120
      %p122 = scmp.ne.s32.totalorder %s113, %s114
      %p123 = scmp.eq.s32.totalorder %s35, 0
      %p124 = por %p122, %p123
      %p125 = scmp.ne.s32.totalorder %s113, %s114
      %p126 = scmp.eq.s32.totalorder %s36, 1
      %p127 = por %p125, %p126
      %p129 = scmp.ne.s32.totalorder %s114, %s128
      %p130 = scmp.eq.s32.totalorder %s36, 0
      %p131 = por %p129, %p130
      %s133 = sadd.s32 %s132, 1
      %p136 = scmp.eq.s32.totalorder %s30, 1
      %p137 = scmp.ne.s32.totalorder %s132, %s134
      %p138 = scmp.eq.s32.totalorder %s30, 0
      %p139 = por %p137, %p138
      %p140 = scmp.ne.s32.totalorder %s132, %s134
      %p141 = scmp.eq.s32.totalorder %s35, 1
      %p142 = por %p140, %p141
      %p143 = scmp.ne.s32.totalorder %s134, %s135
      %p144 = scmp.eq.s32.totalorder %s35, 0
      %p145 = por %p143, %p144
      %p146 = scmp.ne.s32.totalorder %s134, %s135
      %p147 = scmp.eq.s32.totalorder %s36, 1
      %p148 = por %p146, %p147
      %p150 = scmp.ne.s32.totalorder %s135, %s149
      %p151 = scmp.eq.s32.totalorder %s36, 0
      %p152 = por %p150, %p151
      %s154 = sadd.s32 %s153, 1
      %p157 = scmp.eq.s32.totalorder %s30, 1
      %p158 = scmp.ne.s32.totalorder %s153, %s155
      %p159 = scmp.eq.s32.totalorder %s30, 0
      %p160 = por %p158, %p159
      %p161 = scmp.ne.s32.totalorder %s153, %s155
      %p162 = scmp.eq.s32.totalorder %s35, 1
      %p163 = por %p161, %p162
      %p164 = scmp.ne.s32.totalorder %s155, %s156
      %p165 = scmp.eq.s32.totalorder %s35, 0
      %p166 = por %p164, %p165
      %p167 = scmp.ne.s32.totalorder %s155, %s156
      %p168 = scmp.eq.s32.totalorder %s36, 1
      %p169 = por %p167, %p168
      %p171 = scmp.ne.s32.totalorder %s156, %s170
      %p172 = scmp.eq.s32.totalorder %s36, 0
      %p173 = por %p171, %p172
      %s175 = sadd.s32 %s174, 1
      %p178 = scmp.eq.s32.totalorder %s30, 1
      %p179 = scmp.ne.s32.totalorder %s174, %s176
      %p180 = scmp.eq.s32.totalorder %s30, 0
      %p181 = por %p179, %p180
      %p182 = scmp.ne.s32.totalorder %s174, %s176
      %p183 = scmp.eq.s32.totalorder %s35, 1
      %p184 = por %p182, %p183
      %p185 = scmp.ne.s32.totalorder %s176, %s177
      %p186 = scmp.eq.s32.totalorder %s35, 0
      %p187 = por %p185, %p186
      %p188 = scmp.ne.s32.totalorder %s176, %s177
      %p189 = scmp.eq.s32.totalorder %s36, 1
      %p190 = por %p188, %p189
      %p192 = scmp.ne.s32.totalorder %s177, %s191
      %p193 = scmp.eq.s32.totalorder %s36, 0
      %p194 = por %p192, %p193
      %s196 = sadd.s32 %s195, 1
      %p199 = scmp.eq.s32.totalorder %s30, 1
      %p200 = scmp.ne.s32.totalorder %s195, %s197
      %p201 = scmp.eq.s32.totalorder %s30, 0
      %p202 = por %p200, %p201
      %p203 = scmp.ne.s32.totalorder %s195, %s197
      %p204 = scmp.eq.s32.totalorder %s35, 1
      %p205 = por %p203, %p204
      %p206 = scmp.ne.s32.totalorder %s197, %s198
      %p207 = scmp.eq.s32.totalorder %s35, 0
      %p208 = por %p206, %p207
      %p209 = scmp.ne.s32.totalorder %s197, %s198
      %p210 = scmp.eq.s32.totalorder %s36, 1
      %p211 = por %p209, %p210
      %p213 = scmp.ne.s32.totalorder %s198, %s212
      %p214 = scmp.eq.s32.totalorder %s36, 0
      %p215 = por %p213, %p214
      %s217 = sadd.s32 %s216, 1
      %p220 = scmp.eq.s32.totalorder %s30, 1
      %p221 = scmp.ne.s32.totalorder %s216, %s218
      %p222 = scmp.eq.s32.totalorder %s30, 0
      %p223 = por %p221, %p222
      %p224 = scmp.ne.s32.totalorder %s216, %s218
      %p225 = scmp.eq.s32.totalorder %s35, 1
      %p226 = por %p224, %p225
      %p227 = scmp.ne.s32.totalorder %s218, %s219
      %p228 = scmp.eq.s32.totalorder %s35, 0
      %p229 = por %p227, %p228
      %p230 = scmp.ne.s32.totalorder %s218, %s219
      %p231 = scmp.eq.s32.totalorder %s36, 1
      %p232 = por %p230, %p231
      %p234 = scmp.ne.s32.totalorder %s219, %s233
      %p235 = scmp.eq.s32.totalorder %s36, 0
      %p236 = por %p234, %p235
      %s238 = sadd.s32 %s237, 1
      %p241 = scmp.eq.s32.totalorder %s30, 1
      %p242 = scmp.ne.s32.totalorder %s237, %s239
      %p243 = scmp.eq.s32.totalorder %s30, 0
      %p244 = por %p242, %p243
      %p245 = scmp.ne.s32.totalorder %s237, %s239
      %p246 = scmp.eq.s32.totalorder %s35, 1
      %p247 = por %p245, %p246
      %p248 = scmp.ne.s32.totalorder %s239, %s240
      %p249 = scmp.eq.s32.totalorder %s35, 0
      %p250 = por %p248, %p249
      %p251 = scmp.ne.s32.totalorder %s239, %s240
      %p252 = scmp.eq.s32.totalorder %s36, 1
      %p253 = por %p251, %p252
      %p255 = scmp.ne.s32.totalorder %s240, %s254
      %p256 = scmp.eq.s32.totalorder %s36, 0
      %p257 = por %p255, %p256
      %s259 = sadd.s32 %s258, 1
      %p262 = scmp.eq.s32.totalorder %s30, 1
      %p263 = scmp.ne.s32.totalorder %s258, %s260
      %p264 = scmp.eq.s32.totalorder %s30, 0
      %p265 = por %p263, %p264
      %p266 = scmp.ne.s32.totalorder %s258, %s260
      %p267 = scmp.eq.s32.totalorder %s35, 1
      %p268 = por %p266, %p267
      %p269 = scmp.ne.s32.totalorder %s260, %s261
      %p270 = scmp.eq.s32.totalorder %s35, 0
      %p271 = por %p269, %p270
      %p272 = scmp.ne.s32.totalorder %s260, %s261
      %p273 = scmp.eq.s32.totalorder %s36, 1
      %p274 = por %p272, %p273
      %p276 = scmp.ne.s32.totalorder %s261, %s275
      %p277 = scmp.eq.s32.totalorder %s36, 0
      %p278 = por %p276, %p277
      %s280 = sadd.s32 %s279, 1
      %p283 = scmp.eq.s32.totalorder %s30, 1
      %p284 = scmp.ne.s32.totalorder %s279, %s281
      %p285 = scmp.eq.s32.totalorder %s30, 0
      %p286 = por %p284, %p285
      %p287 = scmp.ne.s32.totalorder %s279, %s281
      %p288 = scmp.eq.s32.totalorder %s35, 1
      %p289 = por %p287, %p288
      %p290 = scmp.ne.s32.totalorder %s281, %s282
      %p291 = scmp.eq.s32.totalorder %s35, 0
      %p292 = por %p290, %p291
      %p293 = scmp.ne.s32.totalorder %s281, %s282
      %p294 = scmp.eq.s32.totalorder %s36, 1
      %p295 = por %p293, %p294
      %p297 = scmp.ne.s32.totalorder %s282, %s296
      %p298 = scmp.eq.s32.totalorder %s36, 0
      %p299 = por %p297, %p298
      %s301 = sadd.s32 %s300, 1
      %p304 = scmp.eq.s32.totalorder %s30, 1
      %p305 = scmp.ne.s32.totalorder %s300, %s302
      %p306 = scmp.eq.s32.totalorder %s30, 0
      %p307 = por %p305, %p306
      %p308 = scmp.ne.s32.totalorder %s300, %s302
      %p309 = scmp.eq.s32.totalorder %s35, 1
      %p310 = por %p308, %p309
      %p311 = scmp.ne.s32.totalorder %s302, %s303
      %p312 = scmp.eq.s32.totalorder %s35, 0
      %p313 = por %p311, %p312
      %p314 = scmp.ne.s32.totalorder %s302, %s303
      %p315 = scmp.eq.s32.totalorder %s36, 1
      %p316 = por %p314, %p315
      %p318 = scmp.ne.s32.totalorder %s303, %s317
      %p319 = scmp.eq.s32.totalorder %s36, 0
      %p320 = por %p318, %p319
      %s322 = sadd.s32 %s321, 1
      %p325 = scmp.eq.s32.totalorder %s30, 1
      %p326 = scmp.ne.s32.totalorder %s321, %s323
      %p327 = scmp.eq.s32.totalorder %s30, 0
      %p328 = por %p326, %p327
      %p329 = scmp.ne.s32.totalorder %s321, %s323
      %p330 = scmp.eq.s32.totalorder %s35, 1
      %p331 = por %p329, %p330
      %p332 = scmp.ne.s32.totalorder %s323, %s324
      %p333 = scmp.eq.s32.totalorder %s35, 0
      %p334 = por %p332, %p333
      %p335 = scmp.ne.s32.totalorder %s323, %s324
      %p336 = scmp.eq.s32.totalorder %s36, 1
      %p337 = por %p335, %p336
      %p339 = scmp.ne.s32.totalorder %s324, %s338
      %p340 = scmp.eq.s32.totalorder %s36, 0
      %p341 = por %p339, %p340
      %s343 = sadd.s32 %s342, 1
      %p346 = scmp.eq.s32.totalorder %s30, 1
      %p347 = scmp.ne.s32.totalorder %s342, %s344
      %p348 = scmp.eq.s32.totalorder %s30, 0
      %p349 = por %p347, %p348
      %p350 = scmp.ne.s32.totalorder %s342, %s344
      %p351 = scmp.eq.s32.totalorder %s35, 1
      %p352 = por %p350, %p351
      %p353 = scmp.ne.s32.totalorder %s344, %s345
      %p354 = scmp.eq.s32.totalorder %s35, 0
      %p355 = por %p353, %p354
      %p356 = scmp.ne.s32.totalorder %s344, %s345
      %p357 = scmp.eq.s32.totalorder %s36, 1
      %p358 = por %p356, %p357
      %p360 = scmp.ne.s32.totalorder %s345, %s359
      %p361 = scmp.eq.s32.totalorder %s36, 0
      %p362 = por %p360, %p361
      %s364 = sadd.s32 %s363, 1
      %p367 = scmp.eq.s32.totalorder %s30, 1
      %p368 = scmp.ne.s32.totalorder %s363, %s365
      %p369 = scmp.eq.s32.totalorder %s30, 0
      %p370 = por %p368, %p369
      %p371 = scmp.ne.s32.totalorder %s363, %s365
      %p372 = scmp.eq.s32.totalorder %s35, 1
      %p373 = por %p371, %p372
      %p374 = scmp.ne.s32.totalorder %s365, %s366
      %p375 = scmp.eq.s32.totalorder %s35, 0
      %p376 = por %p374, %p375
      %p377 = scmp.ne.s32.totalorder %s365, %s366
      %p378 = scmp.eq.s32.totalorder %s36, 1
      %p379 = por %p377, %p378
      %p381 = scmp.ne.s32.totalorder %s366, %s380
      %p382 = scmp.eq.s32.totalorder %s36, 0
      %p383 = por %p381, %p382
      %s385 = sadd.s32 %s384, 1
      %p388 = scmp.eq.s32.totalorder %s30, 1
      %p389 = scmp.ne.s32.totalorder %s384, %s386
      %p390 = scmp.eq.s32.totalorder %s30, 0
      %p391 = por %p389, %p390
      %p392 = scmp.ne.s32.totalorder %s384, %s386
      %p393 = scmp.eq.s32.totalorder %s35, 1
      %p394 = por %p392, %p393
      %p395 = scmp.ne.s32.totalorder %s386, %s387
      %p396 = scmp.eq.s32.totalorder %s35, 0
      %p397 = por %p395, %p396
      %p398 = scmp.ne.s32.totalorder %s386, %s387
      %p399 = scmp.eq.s32.totalorder %s36, 1
      %p400 = por %p398, %p399
      %p402 = scmp.ne.s32.totalorder %s387, %s401
      %p403 = scmp.eq.s32.totalorder %s36, 0
      %p404 = por %p402, %p403
      %s406 = sadd.s32 %s405, 1
      %p409 = scmp.eq.s32.totalorder %s30, 1
      %p410 = scmp.ne.s32.totalorder %s405, %s407
      %p411 = scmp.eq.s32.totalorder %s30, 0
      %p412 = por %p410, %p411
      %p413 = scmp.ne.s32.totalorder %s405, %s407
      %p414 = scmp.eq.s32.totalorder %s35, 1
      %p415 = por %p413, %p414
      %p416 = scmp.ne.s32.totalorder %s407, %s408
      %p417 = scmp.eq.s32.totalorder %s35, 0
      %p418 = por %p416, %p417
      %p419 = scmp.ne.s32.totalorder %s407, %s408
      %p420 = scmp.eq.s32.totalorder %s36, 1
      %p421 = por %p419, %p420
      %p423 = scmp.ne.s32.totalorder %s408, %s422
      %p424 = scmp.eq.s32.totalorder %s36, 0
      %p425 = por %p423, %p424
      %s427 = sadd.s32 %s426, 1
      %p430 = scmp.eq.s32.totalorder %s30, 1
      %p431 = scmp.ne.s32.totalorder %s426, %s428
      %p432 = scmp.eq.s32.totalorder %s30, 0
      %p433 = por %p431, %p432
      %p434 = scmp.ne.s32.totalorder %s426, %s428
      %p435 = scmp.eq.s32.totalorder %s35, 1
      %p436 = por %p434, %p435
      %p437 = scmp.ne.s32.totalorder %s428, %s429
      %p438 = scmp.eq.s32.totalorder %s35, 0
      %p439 = por %p437, %p438
      %p440 = scmp.ne.s32.totalorder %s428, %s429
      %p441 = scmp.eq.s32.totalorder %s36, 1
      %p442 = por %p440, %p441
      %p444 = scmp.ne.s32.totalorder %s429, %s443
      %p445 = scmp.eq.s32.totalorder %s36, 0
      %p446 = por %p444, %p445
      %s448 = sadd.s32 %s447, 1
      %p451 = scmp.eq.s32.totalorder %s30, 1
      %p452 = scmp.ne.s32.totalorder %s447, %s449
      %p453 = scmp.eq.s32.totalorder %s30, 0
      %p454 = por %p452, %p453
      %p455 = scmp.ne.s32.totalorder %s447, %s449
      %p456 = scmp.eq.s32.totalorder %s35, 1
      %p457 = por %p455, %p456
      %p458 = scmp.ne.s32.totalorder %s449, %s450
      %p459 = scmp.eq.s32.totalorder %s35, 0
      %p460 = por %p458, %p459
      %p461 = scmp.ne.s32.totalorder %s449, %s450
      %p462 = scmp.eq.s32.totalorder %s36, 1
      %p463 = por %p461, %p462
      %p465 = scmp.ne.s32.totalorder %s450, %s464
      %p466 = scmp.eq.s32.totalorder %s36, 0
      %p467 = por %p465, %p466
      %s469 = sadd.s32 %s468, 1
      %p472 = scmp.eq.s32.totalorder %s30, 1
      %p473 = scmp.ne.s32.totalorder %s468, %s470
      %p474 = scmp.eq.s32.totalorder %s30, 0
      %p475 = por %p473, %p474
      %p476 = scmp.ne.s32.totalorder %s468, %s470
      %p477 = scmp.eq.s32.totalorder %s35, 1
      %p478 = por %p476, %p477
      %p479 = scmp.ne.s32.totalorder %s470, %s471
      %p480 = scmp.eq.s32.totalorder %s35, 0
      %p481 = por %p479, %p480
      %p482 = scmp.ne.s32.totalorder %s470, %s471
      %p483 = scmp.eq.s32.totalorder %s36, 1
      %p484 = por %p482, %p483
      %p486 = scmp.ne.s32.totalorder %s471, %s485
      %p487 = scmp.eq.s32.totalorder %s36, 0
      %p488 = por %p486, %p487
      %s489 = ssub.s32 %s30, %s37
      %p490 = scmp.eq.s32.totalorder %s489, 0
      %s492 = sadd.s32 %s491, 1
      %s493 = scalar_select %p490, %s491, %s492
      %p496 = pneg %p490
      %p497 = scmp.eq.s32.totalorder %s30, 1
      %p498 = por %p496, %p497
      %p499 = scmp.ne.s32.totalorder %s491, %s494
      %p500 = scmp.eq.s32.totalorder %s30, 0
      %p501 = por %p499, %p500
      %p502 = scmp.ne.s32.totalorder %s491, %s494
      %p503 = scmp.eq.s32.totalorder %s35, 1
      %p504 = por %p502, %p503
      %p505 = scmp.ne.s32.totalorder %s494, %s495
      %p506 = scmp.eq.s32.totalorder %s35, 0
      %p507 = por %p505, %p506
      %p508 = scmp.ne.s32.totalorder %s494, %s495
      %p509 = scmp.eq.s32.totalorder %s36, 1
      %p510 = por %p508, %p509
      %p512 = scmp.ne.s32.totalorder %s495, %s511
      %p513 = scmp.eq.s32.totalorder %s36, 0
      %p514 = por %p512, %p513
      %p515 = scmp.le.s32.totalorder 1, %s30
      %p516 = scmp.lt.s32.totalorder %s30, 3
      %p517 = pnand %p515, %p516
      %p518 = pneg %p517
      // Predicated region
      $region9: #{decoder_layer.1} parent=5 // pred_check
        _
      $region10: #{decoder_layer.1} parent=5 // pred_check_branch
        %520 = sbr.rel (%p517) target = $region12
      $region11: #{decoder_layer.1} parent=5 // pred_region
        %s521 = ssub.s32 %s30, 1
        // Predicated region
        $region13: #{decoder_layer.1} parent=11 // pred_check
          %p522 = pneg %p103
        $region14: #{decoder_layer.1} parent=11 // pred_check_branch
          %524 = sbr.rel (%p522) target = $region16
        $region15: #{decoder_layer.1} parent=11 // pred_region
          _
        $region16: #{decoder_layer.1} parent=11 // pred_fallthru
          _
        // Predicated region
        $region17: #{decoder_layer.1} parent=11 // pred_check
          %p525 = pneg %p124
        $region18: #{decoder_layer.1} parent=11 // pred_check_branch
          %527 = sbr.rel (%p525) target = $region20
        $region19: #{decoder_layer.1} parent=11 // pred_region
          _
        $region20: #{decoder_layer.1} parent=11 // pred_fallthru
          _
        // Predicated region
        $region21: #{decoder_layer.1} parent=11 // pred_check
          %p528 = pneg %p145
        $region22: #{decoder_layer.1} parent=11 // pred_check_branch
          %530 = sbr.rel (%p528) target = $region24
        $region23: #{decoder_layer.1} parent=11 // pred_region
          _
        $region24: #{decoder_layer.1} parent=11 // pred_fallthru
          _
        // Predicated region
        $region25: #{decoder_layer.1} parent=11 // pred_check
          %p531 = pneg %p166
        $region26: #{decoder_layer.1} parent=11 // pred_check_branch
          %533 = sbr.rel (%p531) target = $region28
        $region27: #{decoder_layer.1} parent=11 // pred_region
          _
        $region28: #{decoder_layer.1} parent=11 // pred_fallthru
          _
        // Predicated region
        $region29: #{decoder_layer.1} parent=11 // pred_check
          %p534 = pneg %p187
        $region30: #{decoder_layer.1} parent=11 // pred_check_branch
          %536 = sbr.rel (%p534) target = $region32
        $region31: #{decoder_layer.1} parent=11 // pred_region
          _
        $region32: #{decoder_layer.1} parent=11 // pred_fallthru
          _
        // Predicated region
        $region33: #{decoder_layer.1} parent=11 // pred_check
          %p537 = pneg %p208
        $region34: #{decoder_layer.1} parent=11 // pred_check_branch
          %539 = sbr.rel (%p537) target = $region36
        $region35: #{decoder_layer.1} parent=11 // pred_region
          _
        $region36: #{decoder_layer.1} parent=11 // pred_fallthru
          _
        // Predicated region
        $region37: #{decoder_layer.1} parent=11 // pred_check
          %p540 = pneg %p229
        $region38: #{decoder_layer.1} parent=11 // pred_check_branch
          %542 = sbr.rel (%p540) target = $region40
        $region39: #{decoder_layer.1} parent=11 // pred_region
          _
        $region40: #{decoder_layer.1} parent=11 // pred_fallthru
          _
        // Predicated region
        $region41: #{decoder_layer.1} parent=11 // pred_check
          %p543 = pneg %p250
        $region42: #{decoder_layer.1} parent=11 // pred_check_branch
          %545 = sbr.rel (%p543) target = $region44
        $region43: #{decoder_layer.1} parent=11 // pred_region
          _
        $region44: #{decoder_layer.1} parent=11 // pred_fallthru
          _
        // Predicated region
        $region45: #{decoder_layer.1} parent=11 // pred_check
          %p546 = pneg %p271
        $region46: #{decoder_layer.1} parent=11 // pred_check_branch
          %548 = sbr.rel (%p546) target = $region48
        $region47: #{decoder_layer.1} parent=11 // pred_region
          _
        $region48: #{decoder_layer.1} parent=11 // pred_fallthru
          _
        // Predicated region
        $region49: #{decoder_layer.1} parent=11 // pred_check
          %p549 = pneg %p292
        $region50: #{decoder_layer.1} parent=11 // pred_check_branch
          %551 = sbr.rel (%p549) target = $region52
        $region51: #{decoder_layer.1} parent=11 // pred_region
          _
        $region52: #{decoder_layer.1} parent=11 // pred_fallthru
          _
        // Predicated region
        $region53: #{decoder_layer.1} parent=11 // pred_check
          %p552 = pneg %p313
        $region54: #{decoder_layer.1} parent=11 // pred_check_branch
          %554 = sbr.rel (%p552) target = $region56
        $region55: #{decoder_layer.1} parent=11 // pred_region
          _
        $region56: #{decoder_layer.1} parent=11 // pred_fallthru
          _
        // Predicated region
        $region57: #{decoder_layer.1} parent=11 // pred_check
          %p555 = pneg %p334
        $region58: #{decoder_layer.1} parent=11 // pred_check_branch
          %557 = sbr.rel (%p555) target = $region60
        $region59: #{decoder_layer.1} parent=11 // pred_region
          _
        $region60: #{decoder_layer.1} parent=11 // pred_fallthru
          _
        // Predicated region
        $region61: #{decoder_layer.1} parent=11 // pred_check
          %p558 = pneg %p355
        $region62: #{decoder_layer.1} parent=11 // pred_check_branch
          %560 = sbr.rel (%p558) target = $region64
        $region63: #{decoder_layer.1} parent=11 // pred_region
          _
        $region64: #{decoder_layer.1} parent=11 // pred_fallthru
          _
        // Predicated region
        $region65: #{decoder_layer.1} parent=11 // pred_check
          %p561 = pneg %p376
        $region66: #{decoder_layer.1} parent=11 // pred_check_branch
          %563 = sbr.rel (%p561) target = $region68
        $region67: #{decoder_layer.1} parent=11 // pred_region
          _
        $region68: #{decoder_layer.1} parent=11 // pred_fallthru
          _
        // Predicated region
        $region69: #{decoder_layer.1} parent=11 // pred_check
          %p564 = pneg %p397
        $region70: #{decoder_layer.1} parent=11 // pred_check_branch
          %566 = sbr.rel (%p564) target = $region72
        $region71: #{decoder_layer.1} parent=11 // pred_region
          _
        $region72: #{decoder_layer.1} parent=11 // pred_fallthru
          _
        // Predicated region
        $region73: #{decoder_layer.1} parent=11 // pred_check
          %p567 = pneg %p418
        $region74: #{decoder_layer.1} parent=11 // pred_check_branch
          %569 = sbr.rel (%p567) target = $region76
        $region75: #{decoder_layer.1} parent=11 // pred_region
          _
        $region76: #{decoder_layer.1} parent=11 // pred_fallthru
          _
        // Predicated region
        $region77: #{decoder_layer.1} parent=11 // pred_check
          %p570 = pneg %p439
        $region78: #{decoder_layer.1} parent=11 // pred_check_branch
          %572 = sbr.rel (%p570) target = $region80
        $region79: #{decoder_layer.1} parent=11 // pred_region
          _
        $region80: #{decoder_layer.1} parent=11 // pred_fallthru
          _
        // Predicated region
        $region81: #{decoder_layer.1} parent=11 // pred_check
          %p573 = pneg %p460
        $region82: #{decoder_layer.1} parent=11 // pred_check_branch
          %575 = sbr.rel (%p573) target = $region84
        $region83: #{decoder_layer.1} parent=11 // pred_region
          _
        $region84: #{decoder_layer.1} parent=11 // pred_fallthru
          _
        // Predicated region
        $region85: #{decoder_layer.1} parent=11 // pred_check
          %p576 = pneg %p481
        $region86: #{decoder_layer.1} parent=11 // pred_check_branch
          %578 = sbr.rel (%p576) target = $region88
        $region87: #{decoder_layer.1} parent=11 // pred_region
          _
        $region88: #{decoder_layer.1} parent=11 // pred_fallthru
          _
      $region12: #{decoder_layer.1} parent=5 // pred_fallthru
        _
      %p579 = scmp.lt.s32.totalorder %s30, 2
      // Predicated region
      $region89: #{decoder_layer.1} parent=5 // pred_check
        %p580 = pneg %p579
      $region90: #{decoder_layer.1} parent=5 // pred_check_branch
        %582 = sbr.rel (%p580) target = $region92
      $region91: #{decoder_layer.1} parent=5 // pred_region
        // Predicated region
        $region93: #{decoder_layer.1} parent=91 // pred_check
          %p583 = pneg %p50
        $region94: #{decoder_layer.1} parent=91 // pred_check_branch
          %585 = sbr.rel (%p583) target = $region96
        $region95: #{decoder_layer.1} parent=91 // pred_region
          %p586 = scmp.lt.s32.totalorder %s30, 1
          %s587 = scalar_select %p586, %s30, 1
          %s588 = smul.addr %s587, 8
          %s589 = scalar_lea.vmem %s0, %s588
        $region96: #{decoder_layer.1} parent=91 // pred_fallthru
          _
        // Predicated region
        $region97: #{decoder_layer.1} parent=91 // pred_check
          %p590 = pneg %p76
        $region98: #{decoder_layer.1} parent=91 // pred_check_branch
          %592 = sbr.rel (%p590) target = $region100
        $region99: #{decoder_layer.1} parent=91 // pred_region
          %p593 = scmp.lt.s32.totalorder %s30, 1
          %s594 = scalar_select %p593, %s30, 1
          %s595 = smul.addr %s594, 8
          %s596 = scalar_lea.vmem %s1, %s595
        $region100: #{decoder_layer.1} parent=91 // pred_fallthru
          _
      $region92: #{decoder_layer.1} parent=5 // pred_fallthru
        _
      %p597 = scmp.le.s32.totalorder 1, %s30
      %p598 = scmp.lt.s32.totalorder %s30, 3
      %p599 = pnand %p597, %p598
      %p600 = pneg %p599
      // Predicated region
      $region101: #{decoder_layer.1} parent=5 // pred_check
        _
      $region102: #{decoder_layer.1} parent=5 // pred_check_branch
        %602 = sbr.rel (%p599) target = $region104
      $region103: #{decoder_layer.1} parent=5 // pred_region
        %s603 = ssub.s32 %s30, 1
        %p604 = scmp.lt.s32.totalorder %s35, 1
        %s605 = scalar_select %p604, %s35, 1
        %s606 = smul.addr %s605, 8
        %s607 = scalar_lea.vmem %s0, %s606
        %p608 = pneg %p56
        %p609 = pneg %p53
        %p610 = scmp.lt.s32.totalorder %s35, 1
        %s611 = scalar_select %p610, %s35, 1
        %s612 = smul.addr %s611, 8
        %s613 = scalar_lea.vmem %s1, %s612
        %p614 = pneg %p82
        %p615 = pneg %p79
        %p616 = pneg %p103
        %p617 = pneg %p100
        %p618 = pneg %p124
        %p619 = pneg %p121
        %p620 = pneg %p145
        %p621 = pneg %p142
        %p622 = pneg %p166
        %p623 = pneg %p163
        %p624 = pneg %p187
        %p625 = pneg %p184
        %p626 = pneg %p208
        %p627 = pneg %p205
        %p628 = pneg %p229
        %p629 = pneg %p226
        %p630 = pneg %p250
        %p631 = pneg %p247
        %p632 = pneg %p271
        %p633 = pneg %p268
        %p634 = pneg %p292
        %p635 = pneg %p289
        %p636 = pneg %p313
        %p637 = pneg %p310
        %p638 = pneg %p334
        %p639 = pneg %p331
        %p640 = pneg %p355
        %p641 = pneg %p352
        %p642 = pneg %p376
        %p643 = pneg %p373
        %p644 = pneg %p397
        %p645 = pneg %p394
        %p646 = pneg %p418
        %p647 = pneg %p415
        %p648 = pneg %p439
        %p649 = pneg %p436
        %p650 = pneg %p460
        %p651 = pneg %p457
        %p652 = pneg %p481
        %p653 = pneg %p478
        %p654 = pneg %p507
        %p655 = pneg %p504
        %s656 = sand.u32 %s494, 1
        %s657 = scalar_lea.sflag [#allocation4], %s656
        %s658 = sand.u32 %s494, 1
        %s659 = smul.addr %s658, 8
        %s660 = scalar_lea.vmem [#allocation3], %s659
        %p661 = scmp.lt.s32.totalorder %s35, 1
        %s662 = scalar_select %p661, %s35, 1
        %s663 = smul.addr %s662, 8
        %s664 = scalar_lea.vmem %s0, %s663
        %p665 = scmp.lt.s32.totalorder %s35, 1
        %s666 = scalar_select %p665, %s35, 1
        %s667 = smul.addr %s666, 8
        %s668 = scalar_lea.vmem %s1, %s667
        %v670 = vld [vmem:[%s664] sm:$0xff]
        %v671 = vpack.c.bf16 %v670, %v670
        %v672 = vld [vmem:[%s3] sm:$0xf]
        %v673 = vld [vmem:[%s3 + $0x4] sm:$0xf]
        %v674 = vld [vmem:[%s3 + $0x8] sm:$0xf]
        %v675 = vld [vmem:[%s3 + $0xc] sm:$0xf]
        %v676 = vld [vmem:[%s4] sm:$0x1]
        %v678 = vlaneseq
        %v679 = vshrl.u32 %v678, 7
        %v680 = vsub.s32 0, %v679
        %v681 = vrot.slane %v676, %v680
        %v687 = vunpack.c.l.b16 %v672
        %v688 = vunpack.c.l.b16 %v673
        %v689 = vunpack.c.l.b16 %v674
        %v690 = vunpack.c.l.b16 %v675
        %v691 = vpack.c.b16 %v688, %v687
        %v692 = vpack.c.b16 %v690, %v689
        %vm695 = vcmask 261120
        %v697 = vsel %vm695, %v671, 0
        %699 = vmatprep.subr.bf16.mxu0 0
        %700 = vmatpush1.bf16.msra.mxu0 %v691
        %701 = vmatprep.subr.bf16.mxu0 0
        %702 = vmatpush1.bf16.msra.mxu0 %v692
        %703 = vmatprep.subr.bf16.mxu0 0
        %704 = vmatpush1.bf16.msra.mxu0 0
        %705 = vmatprep.subr.bf16.mxu0 0
        %706 = vmatpush1.bf16.msra.mxu0 0
        %707 = vmatprep.subr.bf16.mxu0 0
        %708 = vmatpush1.bf16.msra.mxu0 0
        %709 = vmatprep.subr.bf16.mxu0 0
        %710 = vmatpush1.bf16.msra.mxu0 0
        %711 = vmatprep.subr.bf16.mxu0 0
        %712 = vmatpush1.bf16.msra.mxu0 0
        %713 = vmatprep.subr.bf16.mxu0 0
        %714 = vmatpush1.bf16.msra.mxu0 0
        %715 = vmatprep.subr.bf16.mxu0 0
        %716 = vmatpush1.bf16.msra.mxu0 0
        %717 = vmatprep.subr.bf16.mxu0 0
        %718 = vmatpush1.bf16.msra.mxu0 0
        %719 = vmatprep.subr.bf16.mxu0 0
        %720 = vmatpush1.bf16.msra.mxu0 0
        %721 = vmatprep.subr.bf16.mxu0 0
        %722 = vmatpush1.bf16.msra.mxu0 0
        %723 = vmatprep.subr.bf16.mxu0 0
        %724 = vmatpush1.bf16.msra.mxu0 0
        %725 = vmatprep.subr.bf16.mxu0 0
        %726 = vmatpush1.bf16.msra.mxu0 0
        %727 = vmatprep.subr.bf16.mxu0 0
        %728 = vmatpush1.bf16.msra.mxu0 0
        %729 = vmatprep.subr.bf16.mxu0 0
        %730 = vmatpush1.bf16.msra.mxu0 0
        %731 = vmatprep.mubr.bf16.mxu0 0
        %732 = vmatmul.mubr.bf16.gmra.mrb[0].mxu0 %v697
        %v733 = vpop.f32.mrb[0].mxu0
        %v734 = vadd.f32 %v681, %v733
        %v735 = vpop.f32.mrb[0].mxu0
        %v736 = vpop.f32.mrb[0].mxu0
        %v737 = vpop.f32.mrb[0].mxu0
        %738 = vdwg.mxu0
        %v739 = vmul.f32 %v734, 0.35355338
        %v740 = vpack.c.bf16 %v739, %v739
        %v741 = vpack.c.bf16 %v734, %v734
        %v742 = vld [vmem:[%s2] sm:$0xff]
        %vm743 = vcmp.eq.f32.partialorder %v742, 0.0
        %745 = vrot.lane.b32.xlu0 %v741, 96
        %v746 = vpop.permute.xlu0 %745
        %vm747 = vcmask 64512
        %v749 = vsel %vm747, %v740, 0
        %v752 = vsel %vm747, %v746, 0
        %754 = vmatprep.subr.bf16.mxu0 0
        %755 = vmatpush1.bf16.xpose.msra.mxu0 %v752
        %756 = vmatprep.subr.bf16.mxu0 0
        %757 = vmatpush1.bf16.xpose.msra.mxu0 0
        %758 = vmatprep.subr.bf16.mxu0 0
        %759 = vmatpush1.bf16.xpose.msra.mxu0 0
        %760 = vmatprep.subr.bf16.mxu0 0
        %761 = vmatpush1.bf16.xpose.msra.mxu0 0
        %762 = vmatprep.subr.bf16.mxu0 0
        %763 = vmatpush1.bf16.xpose.msra.mxu0 0
        %764 = vmatprep.subr.bf16.mxu0 0
        %765 = vmatpush1.bf16.xpose.msra.mxu0 0
        %766 = vmatprep.subr.bf16.mxu0 0
        %767 = vmatpush1.bf16.xpose.msra.mxu0 0
        %768 = vmatprep.subr.bf16.mxu0 0
        %769 = vmatpush1.bf16.xpose.msra.mxu0 0
        %770 = vmatprep.subr.bf16.mxu0 0
        %771 = vmatpush1.bf16.xpose.msra.mxu0 0
        %772 = vmatprep.subr.bf16.mxu0 0
        %773 = vmatpush1.bf16.xpose.msra.mxu0 0
        %774 = vmatprep.subr.bf16.mxu0 0
        %775 = vmatpush1.bf16.xpose.msra.mxu0 0
        %776 = vmatprep.subr.bf16.mxu0 0
        %777 = vmatpush1.bf16.xpose.msra.mxu0 0
        %778 = vmatprep.subr.bf16.mxu0 0
        %779 = vmatpush1.bf16.xpose.msra.mxu0 0
        %780 = vmatprep.subr.bf16.mxu0 0
        %781 = vmatpush1.bf16.xpose.msra.mxu0 0
        %782 = vmatprep.subr.bf16.mxu0 0
        %783 = vmatpush1.bf16.xpose.msra.mxu0 0
        %784 = vmatprep.subr.bf16.mxu0 0
        %785 = vmatpush1.bf16.xpose.msra.mxu0 0
        %786 = vmatprep.mubr.bf16.mxu0 0
        %787 = vmatmul.mubr.bf16.gmra.mrb[0].mxu0 %v749
        %v788 = vpop.f32.mrb[0].mxu0
        %v789 = vadd.f32 0.0, %v788
        %v790 = vpop.f32.mrb[0].mxu0
        %v791 = vpop.f32.mrb[0].mxu0
        %v792 = vpop.f32.mrb[0].mxu0
        %793 = vdwg.mxu0
        %v794 = vsel %vm743, 1e-09, %v789
        %v795 = vsel %vm747, %v794, -inf
        %796 = vmax.xlane.f32.xlu0 %v795
        %v797 = vpop.xlane.xlu0 %796
        %v798 = vsub.f32 %v794, %v797
        %v799 = vmul.f32 %v798, 1.442695
        %v800 = vpow.pop %v799
        %v801 = vsel %vm747, %v800, 0.0
        %802 = vadd.xlane.f32.xlu0 %v801
        %v803 = vpop.xlane.xlu0 %802
        %v804 = vrcp.pop %v803
        %v805 = vmul.f32 %v800, %v804
        %v806 = vpack.c.bf16 %v805, %v805
        %807 = vrot.lane.b32.xlu0 %v741, 64
        %v808 = vpop.permute.xlu0 %807
        %v810 = vsel %vm747, %v806, 0
        %vm812 = vcmask 1043456
        %v814 = vsel %vm812, %v808, 0
        %816 = vmatprep.subr.bf16.mxu0 0
        %817 = vmatpush1.bf16.msra.mxu0 %v814
        %818 = vmatprep.subr.bf16.mxu0 0
        %819 = vmatpush1.bf16.msra.mxu0 0
        %820 = vmatprep.subr.bf16.mxu0 0
        %821 = vmatpush1.bf16.msra.mxu0 0
        %822 = vmatprep.subr.bf16.mxu0 0
        %823 = vmatpush1.bf16.msra.mxu0 0
        %824 = vmatprep.subr.bf16.mxu0 0
        %825 = vmatpush1.bf16.msra.mxu0 0
        %826 = vmatprep.subr.bf16.mxu0 0
        %827 = vmatpush1.bf16.msra.mxu0 0
        %828 = vmatprep.subr.bf16.mxu0 0
        %829 = vmatpush1.bf16.msra.mxu0 0
        %830 = vmatprep.subr.bf16.mxu0 0
        %831 = vmatpush1.bf16.msra.mxu0 0
        %832 = vmatprep.subr.bf16.mxu0 0
        %833 = vmatpush1.bf16.msra.mxu0 0
        %834 = vmatprep.subr.bf16.mxu0 0
        %835 = vmatpush1.bf16.msra.mxu0 0
        %836 = vmatprep.subr.bf16.mxu0 0
        %837 = vmatpush1.bf16.msra.mxu0 0
        %838 = vmatprep.subr.bf16.mxu0 0
        %839 = vmatpush1.bf16.msra.mxu0 0
        %840 = vmatprep.subr.bf16.mxu0 0
        %841 = vmatpush1.bf16.msra.mxu0 0
        %842 = vmatprep.subr.bf16.mxu0 0
        %843 = vmatpush1.bf16.msra.mxu0 0
        %844 = vmatprep.subr.bf16.mxu0 0
        %845 = vmatpush1.bf16.msra.mxu0 0
        %846 = vmatprep.subr.bf16.mxu0 0
        %847 = vmatpush1.bf16.msra.mxu0 0
        %848 = vmatprep.mubr.bf16.mxu0 0
        %849 = vmatmul.mubr.bf16.gmra.mrb[0].mxu0 %v810
        %v850 = vpop.f32.mrb[0].mxu0
        %v851 = vadd.f32 0.0, %v850
        %v852 = vpop.f32.mrb[0].mxu0
        %v853 = vpop.f32.mrb[0].mxu0
        %v854 = vpop.f32.mrb[0].mxu0
        %855 = vdwg.mxu0
        %856 = vst.msk [vmem:[#allocation2] sm:$0xff] %vm747, %v851
        %858 = vrot.lane.b32.xlu0 %v740, 120
        %v859 = vpop.permute.xlu0 %858
        %860 = vrot.lane.b32.xlu0 %v741, 88
        %v861 = vpop.permute.xlu0 %860
        %v863 = vsel %vm747, %v859, 0
        %v866 = vsel %vm747, %v861, 0
        %868 = vmatprep.subr.bf16.mxu0 0
        %869 = vmatpush1.bf16.xpose.msra.mxu0 %v866
        %870 = vmatprep.subr.bf16.mxu0 0
        %871 = vmatpush1.bf16.xpose.msra.mxu0 0
        %872 = vmatprep.subr.bf16.mxu0 0
        %873 = vmatpush1.bf16.xpose.msra.mxu0 0
        %874 = vmatprep.subr.bf16.mxu0 0
        %875 = vmatpush1.bf16.xpose.msra.mxu0 0
        %876 = vmatprep.subr.bf16.mxu0 0
        %877 = vmatpush1.bf16.xpose.msra.mxu0 0
        %878 = vmatprep.subr.bf16.mxu0 0
        %879 = vmatpush1.bf16.xpose.msra.mxu0 0
        %880 = vmatprep.subr.bf16.mxu0 0
        %881 = vmatpush1.bf16.xpose.msra.mxu0 0
        %882 = vmatprep.subr.bf16.mxu0 0
        %883 = vmatpush1.bf16.xpose.msra.mxu0 0
        %884 = vmatprep.subr.bf16.mxu0 0
        %885 = vmatpush1.bf16.xpose.msra.mxu0 0
        %886 = vmatprep.subr.bf16.mxu0 0
        %887 = vmatpush1.bf16.xpose.msra.mxu0 0
        %888 = vmatprep.subr.bf16.mxu0 0
        %889 = vmatpush1.bf16.xpose.msra.mxu0 0
        %890 = vmatprep.subr.bf16.mxu0 0
        %891 = vmatpush1.bf16.xpose.msra.mxu0 0
        %892 = vmatprep.subr.bf16.mxu0 0
        %893 = vmatpush1.bf16.xpose.msra.mxu0 0
        %894 = vmatprep.subr.bf16.mxu0 0
        %895 = vmatpush1.bf16.xpose.msra.mxu0 0
        %896 = vmatprep.subr.bf16.mxu0 0
        %897 = vmatpush1.bf16.xpose.msra.mxu0 0
        %898 = vmatprep.subr.bf16.mxu0 0
        %899 = vmatpush1.bf16.xpose.msra.mxu0 0
        %900 = vmatprep.mubr.bf16.mxu0 0
        %901 = vmatmul.mubr.bf16.gmra.mrb[0].mxu0 %v863
        %v902 = vpop.f32.mrb[0].mxu0
        %v903 = vadd.f32 0.0, %v902
        %v904 = vpop.f32.mrb[0].mxu0
        %v905 = vpop.f32.mrb[0].mxu0
        %v906 = vpop.f32.mrb[0].mxu0
        %907 = vdwg.mxu0
        %v908 = vsel %vm743, 1e-09, %v903
        %v909 = vsel %vm747, %v908, -inf
        %910 = vmax.xlane.f32.xlu0 %v909
        %v911 = vpop.xlane.xlu0 %910
        %v912 = vsub.f32 %v908, %v911
        %v913 = vmul.f32 %v912, 1.442695
        %v914 = vpow.pop %v913
        %v915 = vsel %vm747, %v914, 0.0
        %916 = vadd.xlane.f32.xlu0 %v915
        %v917 = vpop.xlane.xlu0 %916
        %v918 = vrcp.pop %v917
        %v919 = vmul.f32 %v914, %v918
        %v920 = vpack.c.bf16 %v919, %v919
        %921 = vrot.lane.b32.xlu0 %v741, 56
        %v922 = vpop.permute.xlu0 %921
        %v924 = vsel %vm747, %v920, 0
        %v927 = vsel %vm812, %v922, 0
        %929 = vmatprep.subr.bf16.mxu0 0
        %930 = vmatpush1.bf16.msra.mxu0 %v927
        %931 = vmatprep.subr.bf16.mxu0 0
        %932 = vmatpush1.bf16.msra.mxu0 0
        %933 = vmatprep.subr.bf16.mxu0 0
        %934 = vmatpush1.bf16.msra.mxu0 0
        %935 = vmatprep.subr.bf16.mxu0 0
        %936 = vmatpush1.bf16.msra.mxu0 0
        %937 = vmatprep.subr.bf16.mxu0 0
        %938 = vmatpush1.bf16.msra.mxu0 0
        %939 = vmatprep.subr.bf16.mxu0 0
        %940 = vmatpush1.bf16.msra.mxu0 0
        %941 = vmatprep.subr.bf16.mxu0 0
        %942 = vmatpush1.bf16.msra.mxu0 0
        %943 = vmatprep.subr.bf16.mxu0 0
        %944 = vmatpush1.bf16.msra.mxu0 0
        %945 = vmatprep.subr.bf16.mxu0 0
        %946 = vmatpush1.bf16.msra.mxu0 0
        %947 = vmatprep.subr.bf16.mxu0 0
        %948 = vmatpush1.bf16.msra.mxu0 0
        %949 = vmatprep.subr.bf16.mxu0 0
        %950 = vmatpush1.bf16.msra.mxu0 0
        %951 = vmatprep.subr.bf16.mxu0 0
        %952 = vmatpush1.bf16.msra.mxu0 0
        %953 = vmatprep.subr.bf16.mxu0 0
        %954 = vmatpush1.bf16.msra.mxu0 0
        %955 = vmatprep.subr.bf16.mxu0 0
        %956 = vmatpush1.bf16.msra.mxu0 0
        %957 = vmatprep.subr.bf16.mxu0 0
        %958 = vmatpush1.bf16.msra.mxu0 0
        %959 = vmatprep.subr.bf16.mxu0 0
        %960 = vmatpush1.bf16.msra.mxu0 0
        %961 = vmatprep.mubr.bf16.mxu0 0
        %962 = vmatmul.mubr.bf16.gmra.mrb[0].mxu0 %v924
        %v963 = vpop.f32.mrb[0].mxu0
        %v964 = vadd.f32 0.0, %v963
        %v965 = vpop.f32.mrb[0].mxu0
        %v966 = vpop.f32.mrb[0].mxu0
        %v967 = vpop.f32.mrb[0].mxu0
        %968 = vdwg.mxu0
        %970 = vrot.lane.b32.xlu0 %v964, 8
        %v971 = vpop.permute.xlu0 %970
        %vm973 = vcmask 130112
        %974 = vst.msk [vmem:[#allocation2] sm:$0xff] %vm973, %v971
        %975 = vrot.lane.b32.xlu0 %v740, 112
        %v976 = vpop.permute.xlu0 %975
        %977 = vrot.lane.b32.xlu0 %v741, 80
        %v978 = vpop.permute.xlu0 %977
        %v980 = vsel %vm747, %v976, 0
        %v983 = vsel %vm747, %v978, 0
        %985 = vmatprep.subr.bf16.mxu0 0
        %986 = vmatpush1.bf16.xpose.msra.mxu0 %v983
        %987 = vmatprep.subr.bf16.mxu0 0
        %988 = vmatpush1.bf16.xpose.msra.mxu0 0
        %989 = vmatprep.subr.bf16.mxu0 0
        %990 = vmatpush1.bf16.xpose.msra.mxu0 0
        %991 = vmatprep.subr.bf16.mxu0 0
        %992 = vmatpush1.bf16.xpose.msra.mxu0 0
        %993 = vmatprep.subr.bf16.mxu0 0
        %994 = vmatpush1.bf16.xpose.msra.mxu0 0
        %995 = vmatprep.subr.bf16.mxu0 0
        %996 = vmatpush1.bf16.xpose.msra.mxu0 0
        %997 = vmatprep.subr.bf16.mxu0 0
        %998 = vmatpush1.bf16.xpose.msra.mxu0 0
        %999 = vmatprep.subr.bf16.mxu0 0
        %1000 = vmatpush1.bf16.xpose.msra.mxu0 0
        %1001 = vmatprep.subr.bf16.mxu0 0
        %1002 = vmatpush1.bf16.xpose.msra.mxu0 0
        %1003 = vmatprep.subr.bf16.mxu0 0
        %1004 = vmatpush1.bf16.xpose.msra.mxu0 0
        %1005 = vmatprep.subr.bf16.mxu0 0
        %1006 = vmatpush1.bf16.xpose.msra.mxu0 0
        %1007 = vmatprep.subr.bf16.mxu0 0
        %1008 = vmatpush1.bf16.xpose.msra.mxu0 0
        %1009 = vmatprep.subr.bf16.mxu0 0
        %1010 = vmatpush1.bf16.xpose.msra.mxu0 0
        %1011 = vmatprep.subr.bf16.mxu0 0
        %1012 = vmatpush1.bf16.xpose.msra.mxu0 0
        %1013 = vmatprep.subr.bf16.mxu0 0
        %1014 = vmatpush1.bf16.xpose.msra.mxu0 0
        %1015 = vmatprep.subr.bf16.mxu0 0
        %1016 = vmatpush1.bf16.xpose.msra.mxu0 0
        %1017 = vmatprep.mubr.bf16.mxu0 0
        %1018 = vmatmul.mubr.bf16.gmra.mrb[0].mxu0 %v980
        %v1019 = vpop.f32.mrb[0].mxu0
        %v1020 = vadd.f32 0.0, %v1019
        %v1021 = vpop.f32.mrb[0].mxu0
        %v1022 = vpop.f32.mrb[0].mxu0
        %v1023 = vpop.f32.mrb[0].mxu0
        %1024 = vdwg.mxu0
        %v1025 = vsel %vm743, 1e-09, %v1020
        %v1026 = vsel %vm747, %v1025, -inf
        %1027 = vmax.xlane.f32.xlu0 %v1026
        %v1028 = vpop.xlane.xlu0 %1027
        %v1029 = vsub.f32 %v1025, %v1028
        %v1030 = vmul.f32 %v1029, 1.442695
        %v1031 = vpow.pop %v1030
        %v1032 = vsel %vm747, %v1031, 0.0
        %1033 = vadd.xlane.f32.xlu0 %v1032
        %v1034 = vpop.xlane.xlu0 %1033
        %v1035 = vrcp.pop %v1034
        %v1036 = vmul.f32 %v1031, %v1035
        %v1037 = vpack.c.bf16 %v1036, %v1036
        %1038 = vrot.lane.b32.xlu0 %v741, 48
        %v1039 = vpop.permute.xlu0 %1038
        %v1041 = vsel %vm747, %v1037, 0
        %v1044 = vsel %vm812, %v1039, 0
        %1046 = vmatprep.subr.bf16.mxu0 0
        %1047 = vmatpush1.bf16.msra.mxu0 %v1044
        %1048 = vmatprep.subr.bf16.mxu0 0
        %1049 = vmatpush1.bf16.msra.mxu0 0
        %1050 = vmatprep.subr.bf16.mxu0 0
        %1051 = vmatpush1.bf16.msra.mxu0 0
        %1052 = vmatprep.subr.bf16.mxu0 0
        %1053 = vmatpush1.bf16.msra.mxu0 0
        %1054 = vmatprep.subr.bf16.mxu0 0
        %1055 = vmatpush1.bf16.msra.mxu0 0
        %1056 = vmatprep.subr.bf16.mxu0 0
        %1057 = vmatpush1.bf16.msra.mxu0 0
        %1058 = vmatprep.subr.bf16.mxu0 0
        %1059 = vmatpush1.bf16.msra.mxu0 0
        %1060 = vmatprep.subr.bf16.mxu0 0
        %1061 = vmatpush1.bf16.msra.mxu0 0
        %1062 = vmatprep.subr.bf16.mxu0 0
        %1063 = vmatpush1.bf16.msra.mxu0 0
        %1064 = vmatprep.subr.bf16.mxu0 0
        %1065 = vmatpush1.bf16.msra.mxu0 0
        %1066 = vmatprep.subr.bf16.mxu0 0
        %1067 = vmatpush1.bf16.msra.mxu0 0
        %1068 = vmatprep.subr.bf16.mxu0 0
        %1069 = vmatpush1.bf16.msra.mxu0 0
        %1070 = vmatprep.subr.bf16.mxu0 0
        %1071 = vmatpush1.bf16.msra.mxu0 0
        %1072 = vmatprep.subr.bf16.mxu0 0
        %1073 = vmatpush1.bf16.msra.mxu0 0
        %1074 = vmatprep.subr.bf16.mxu0 0
        %1075 = vmatpush1.bf16.msra.mxu0 0
        %1076 = vmatprep.subr.bf16.mxu0 0
        %1077 = vmatpush1.bf16.msra.mxu0 0
        %1078 = vmatprep.mubr.bf16.mxu0 0
        %1079 = vmatmul.mubr.bf16.gmra.mrb[0].mxu0 %v1041
        %v1080 = vpop.f32.mrb[0].mxu0
        %v1081 = vadd.f32 0.0, %v1080
        %v1082 = vpop.f32.mrb[0].mxu0
        %v1083 = vpop.f32.mrb[0].mxu0
        %v1084 = vpop.f32.mrb[0].mxu0
        %1085 = vdwg.mxu0
        %1087 = vrot.lane.b32.xlu0 %v1081, 16
        %v1088 = vpop.permute.xlu0 %1087
        %vm1090 = vcmask 195712
        %1091 = vst.msk [vmem:[#allocation2] sm:$0xff] %vm1090, %v1088
        %1092 = vrot.lane.b32.xlu0 %v740, 104
        %v1093 = vpop.permute.xlu0 %1092
        %1094 = vrot.lane.b32.xlu0 %v741, 72
        %v1095 = vpop.permute.xlu0 %1094
        %v1097 = vsel %vm747, %v1093, 0
        %v1100 = vsel %vm747, %v1095, 0
        %1102 = vmatprep.subr.bf16.mxu0 0
        %1103 = vmatpush1.bf16.xpose.msra.mxu0 %v1100
        %1104 = vmatprep.subr.bf16.mxu0 0
        %1105 = vmatpush1.bf16.xpose.msra.mxu0 0
        %1106 = vmatprep.subr.bf16.mxu0 0
        %1107 = vmatpush1.bf16.xpose.msra.mxu0 0
        %1108 = vmatprep.subr.bf16.mxu0 0
        %1109 = vmatpush1.bf16.xpose.msra.mxu0 0
        %1110 = vmatprep.subr.bf16.mxu0 0
        %1111 = vmatpush1.bf16.xpose.msra.mxu0 0
        %1112 = vmatprep.subr.bf16.mxu0 0
        %1113 = vmatpush1.bf16.xpose.msra.mxu0 0
        %1114 = vmatprep.subr.bf16.mxu0 0
        %1115 = vmatpush1.bf16.xpose.msra.mxu0 0
        %1116 = vmatprep.subr.bf16.mxu0 0
        %1117 = vmatpush1.bf16.xpose.msra.mxu0 0
        %1118 = vmatprep.subr.bf16.mxu0 0
        %1119 = vmatpush1.bf16.xpose.msra.mxu0 0
        %1120 = vmatprep.subr.bf16.mxu0 0
        %1121 = vmatpush1.bf16.xpose.msra.mxu0 0
        %1122 = vmatprep.subr.bf16.mxu0 0
        %1123 = vmatpush1.bf16.xpose.msra.mxu0 0
        %1124 = vmatprep.subr.bf16.mxu0 0
        %1125 = vmatpush1.bf16.xpose.msra.mxu0 0
        %1126 = vmatprep.subr.bf16.mxu0 0
        %1127 = vmatpush1.bf16.xpose.msra.mxu0 0
        %1128 = vmatprep.subr.bf16.mxu0 0
        %1129 = vmatpush1.bf16.xpose.msra.mxu0 0
        %1130 = vmatprep.subr.bf16.mxu0 0
        %1131 = vmatpush1.bf16.xpose.msra.mxu0 0
        %1132 = vmatprep.subr.bf16.mxu0 0
        %1133 = vmatpush1.bf16.xpose.msra.mxu0 0
        %1134 = vmatprep.mubr.bf16.mxu0 0
        %1135 = vmatmul.mubr.bf16.gmra.mrb[0].mxu0 %v1097
        %v1136 = vpop.f32.mrb[0].mxu0
        %v1137 = vadd.f32 0.0, %v1136
        %v1138 = vpop.f32.mrb[0].mxu0
        %v1139 = vpop.f32.mrb[0].mxu0
        %v1140 = vpop.f32.mrb[0].mxu0
        %1141 = vdwg.mxu0
        %v1142 = vsel %vm743, 1e-09, %v1137
        %v1143 = vsel %vm747, %v1142, -inf
        %1144 = vmax.xlane.f32.xlu0 %v1143
        %v1145 = vpop.xlane.xlu0 %1144
        %v1146 = vsub.f32 %v1142, %v1145
        %v1147 = vmul.f32 %v1146, 1.442695
        %v1148 = vpow.pop %v1147
        %v1149 = vsel %vm747, %v1148, 0.0
        %1150 = vadd.xlane.f32.xlu0 %v1149
        %v1151 = vpop.xlane.xlu0 %1150
        %v1152 = vrcp.pop %v1151
        %v1153 = vmul.f32 %v1148, %v1152
        %v1154 = vpack.c.bf16 %v1153, %v1153
        %1155 = vrot.lane.b32.xlu0 %v741, 40
        %v1156 = vpop.permute.xlu0 %1155
        %v1158 = vsel %vm747, %v1154, 0
        %v1161 = vsel %vm812, %v1156, 0
        %1163 = vmatprep.subr.bf16.mxu0 0
        %1164 = vmatpush1.bf16.msra.mxu0 %v1161
        %1165 = vmatprep.subr.bf16.mxu0 0
        %1166 = vmatpush1.bf16.msra.mxu0 0
        %1167 = vmatprep.subr.bf16.mxu0 0
        %1168 = vmatpush1.bf16.msra.mxu0 0
        %1169 = vmatprep.subr.bf16.mxu0 0
        %1170 = vmatpush1.bf16.msra.mxu0 0
        %1171 = vmatprep.subr.bf16.mxu0 0
        %1172 = vmatpush1.bf16.msra.mxu0 0
        %1173 = vmatprep.subr.bf16.mxu0 0
        %1174 = vmatpush1.bf16.msra.mxu0 0
        %1175 = vmatprep.subr.bf16.mxu0 0
        %1176 = vmatpush1.bf16.msra.mxu0 0
        %1177 = vmatprep.subr.bf16.mxu0 0
        %1178 = vmatpush1.bf16.msra.mxu0 0
        %1179 = vmatprep.subr.bf16.mxu0 0
        %1180 = vmatpush1.bf16.msra.mxu0 0
        %1181 = vmatprep.subr.bf16.mxu0 0
        %1182 = vmatpush1.bf16.msra.mxu0 0
        %1183 = vmatprep.subr.bf16.mxu0 0
        %1184 = vmatpush1.bf16.msra.mxu0 0
        %1185 = vmatprep.subr.bf16.mxu0 0
        %1186 = vmatpush1.bf16.msra.mxu0 0
        %1187 = vmatprep.subr.bf16.mxu0 0
        %1188 = vmatpush1.bf16.msra.mxu0 0
        %1189 = vmatprep.subr.bf16.mxu0 0
        %1190 = vmatpush1.bf16.msra.mxu0 0
        %1191 = vmatprep.subr.bf16.mxu0 0
        %1192 = vmatpush1.bf16.msra.mxu0 0
        %1193 = vmatprep.subr.bf16.mxu0 0
        %1194 = vmatpush1.bf16.msra.mxu0 0
        %1195 = vmatprep.mubr.bf16.mxu0 0
        %1196 = vmatmul.mubr.bf16.gmra.mrb[0].mxu0 %v1158
        %v1197 = vpop.f32.mrb[0].mxu0
        %v1198 = vadd.f32 0.0, %v1197
        %v1199 = vpop.f32.mrb[0].mxu0
        %v1200 = vpop.f32.mrb[0].mxu0
        %v1201 = vpop.f32.mrb[0].mxu0
        %1202 = vdwg.mxu0
        %1204 = vrot.lane.b32.xlu0 %v1198, 24
        %v1205 = vpop.permute.xlu0 %1204
        %vm1207 = vcmask 261312
        %1208 = vst.msk [vmem:[#allocation2] sm:$0xff] %vm1207, %v1205
        %v1209 = vld [vmem:[#allocation2] sm:$0xff]
        %v1210 = vpack.c.bf16 %v1209, %v1209
        %v1211 = vld [vmem:[%s5] sm:$0xf]
        %v1212 = vld [vmem:[%s5 + $0x4] sm:$0xf]
        %v1213 = vld [vmem:[%s5 + $0x8] sm:$0xf]
        %v1214 = vld [vmem:[%s5 + $0xc] sm:$0xf]
        %v1215 = vld [vmem:[%s6] sm:$0x1]
        %v1217 = vlaneseq
        %v1218 = vshrl.u32 %v1217, 7
        %v1219 = vsub.s32 0, %v1218
        %v1220 = vrot.slane %v1215, %v1219
        %v1226 = vunpack.c.l.b16 %v1211
        %v1227 = vunpack.c.l.b16 %v1212
        %v1228 = vunpack.c.l.b16 %v1213
        %v1229 = vunpack.c.l.b16 %v1214
        %v1230 = vpack.c.b16 %v1227, %v1226
        %v1231 = vpack.c.b16 %v1229, %v1228
        %v1235 = vsel %vm695, %v1210, 0
        %1237 = vmatprep.subr.bf16.mxu0 0
        %1238 = vmatpush1.bf16.msra.mxu0 %v1230
        %1239 = vmatprep.subr.bf16.mxu0 0
        %1240 = vmatpush1.bf16.msra.mxu0 %v1231
        %1241 = vmatprep.subr.bf16.mxu0 0
        %1242 = vmatpush1.bf16.msra.mxu0 0
        %1243 = vmatprep.subr.bf16.mxu0 0
        %1244 = vmatpush1.bf16.msra.mxu0 0
        %1245 = vmatprep.subr.bf16.mxu0 0
        %1246 = vmatpush1.bf16.msra.mxu0 0
        %1247 = vmatprep.subr.bf16.mxu0 0
        %1248 = vmatpush1.bf16.msra.mxu0 0
        %1249 = vmatprep.subr.bf16.mxu0 0
        %1250 = vmatpush1.bf16.msra.mxu0 0
        %1251 = vmatprep.subr.bf16.mxu0 0
        %1252 = vmatpush1.bf16.msra.mxu0 0
        %1253 = vmatprep.subr.bf16.mxu0 0
        %1254 = vmatpush1.bf16.msra.mxu0 0
        %1255 = vmatprep.subr.bf16.mxu0 0
        %1256 = vmatpush1.bf16.msra.mxu0 0
        %1257 = vmatprep.subr.bf16.mxu0 0
        %1258 = vmatpush1.bf16.msra.mxu0 0
        %1259 = vmatprep.subr.bf16.mxu0 0
        %1260 = vmatpush1.bf16.msra.mxu0 0
        %1261 = vmatprep.subr.bf16.mxu0 0
        %1262 = vmatpush1.bf16.msra.mxu0 0
        %1263 = vmatprep.subr.bf16.mxu0 0
        %1264 = vmatpush1.bf16.msra.mxu0 0
        %1265 = vmatprep.subr.bf16.mxu0 0
        %1266 = vmatpush1.bf16.msra.mxu0 0
        %1267 = vmatprep.subr.bf16.mxu0 0
        %1268 = vmatpush1.bf16.msra.mxu0 0
        %1269 = vmatprep.mubr.bf16.mxu0 0
        %1270 = vmatmul.mubr.bf16.gmra.mrb[0].mxu0 %v1235
        %v1271 = vpop.f32.mrb[0].mxu0
        %v1272 = vadd.f32 %v1220, %v1271
        %v1273 = vpop.f32.mrb[0].mxu0
        %v1274 = vpop.f32.mrb[0].mxu0
        %v1275 = vpop.f32.mrb[0].mxu0
        %1276 = vdwg.mxu0
        %v1277 = vadd.f32 %v1209, %v1272
        %v1278 = vsel %vm695, %v1277, 0.0
        %1279 = vadd.xlane.f32.xlu0 %v1278
        %v1280 = vpop.xlane.xlu0 %1279
        %v1281 = vrcp.pop 32.0
        %v1282 = vmul.f32 %v1280, %v1281
        %v1283 = vsub.f32 %v1277, %v1282
        %v1284 = vmul.f32 %v1283, %v1283
        %v1285 = vsel %vm695, %v1284, 0.0
        %1286 = vadd.xlane.f32.xlu0 %v1285
        %v1287 = vpop.xlane.xlu0 %1286
        %v1288 = vmul.f32 %v1287, %v1281
        %v1289 = vadd.f32 %v1288, 1e-05
        %v1290 = vrsqrt.pop %v1289
        %v1291 = vmul.f32 %v1283, %v1290
        %v1292 = vld [vmem:[%s7] sm:$0x1]
        %v1294 = vlaneseq
        %v1295 = vshrl.u32 %v1294, 7
        %v1296 = vsub.s32 0, %v1295
        %v1297 = vrot.slane %v1292, %v1296
        %v1299 = vmul.f32 %v1291, %v1297
        %v1300 = vld [vmem:[%s8] sm:$0x1]
        %v1302 = vlaneseq
        %v1303 = vshrl.u32 %v1302, 7
        %v1304 = vsub.s32 0, %v1303
        %v1305 = vrot.slane %v1300, %v1304
        %v1307 = vadd.f32 %v1299, %v1305
        %v1308 = vpack.c.bf16 %v1307, %v1307
        %v1309 = vld [vmem:[%s9] sm:$0xf]
        %v1310 = vld [vmem:[%s9 + $0x4] sm:$0xf]
        %v1311 = vld [vmem:[%s9 + $0x8] sm:$0xf]
        %v1312 = vld [vmem:[%s9 + $0xc] sm:$0xf]
        %v1313 = vld [vmem:[%s10] sm:$0x1]
        %v1315 = vlaneseq
        %v1316 = vshrl.u32 %v1315, 7
        %v1317 = vsub.s32 0, %v1316
        %v1318 = vrot.slane %v1313, %v1317
        %v1324 = vunpack.c.l.b16 %v1309
        %v1325 = vunpack.c.l.b16 %v1310
        %v1326 = vunpack.c.l.b16 %v1311
        %v1327 = vunpack.c.l.b16 %v1312
        %v1328 = vpack.c.b16 %v1325, %v1324
        %v1329 = vpack.c.b16 %v1327, %v1326
        %v1333 = vsel %vm695, %v1308, 0
        %1335 = vmatprep.subr.bf16.mxu0 0
        %1336 = vmatpush1.bf16.msra.mxu0 %v1328
        %1337 = vmatprep.subr.bf16.mxu0 0
        %1338 = vmatpush1.bf16.msra.mxu0 %v1329
        %1339 = vmatprep.subr.bf16.mxu0 0
        %1340 = vmatpush1.bf16.msra.mxu0 0
        %1341 = vmatprep.subr.bf16.mxu0 0
        %1342 = vmatpush1.bf16.msra.mxu0 0
        %1343 = vmatprep.subr.bf16.mxu0 0
        %1344 = vmatpush1.bf16.msra.mxu0 0
        %1345 = vmatprep.subr.bf16.mxu0 0
        %1346 = vmatpush1.bf16.msra.mxu0 0
        %1347 = vmatprep.subr.bf16.mxu0 0
        %1348 = vmatpush1.bf16.msra.mxu0 0
        %1349 = vmatprep.subr.bf16.mxu0 0
        %1350 = vmatpush1.bf16.msra.mxu0 0
        %1351 = vmatprep.subr.bf16.mxu0 0
        %1352 = vmatpush1.bf16.msra.mxu0 0
        %1353 = vmatprep.subr.bf16.mxu0 0
        %1354 = vmatpush1.bf16.msra.mxu0 0
        %1355 = vmatprep.subr.bf16.mxu0 0
        %1356 = vmatpush1.bf16.msra.mxu0 0
        %1357 = vmatprep.subr.bf16.mxu0 0
        %1358 = vmatpush1.bf16.msra.mxu0 0
        %1359 = vmatprep.subr.bf16.mxu0 0
        %1360 = vmatpush1.bf16.msra.mxu0 0
        %1361 = vmatprep.subr.bf16.mxu0 0
        %1362 = vmatpush1.bf16.msra.mxu0 0
        %1363 = vmatprep.subr.bf16.mxu0 0
        %1364 = vmatpush1.bf16.msra.mxu0 0
        %1365 = vmatprep.subr.bf16.mxu0 0
        %1366 = vmatpush1.bf16.msra.mxu0 0
        %1367 = vmatprep.mubr.bf16.mxu0 0
        %1368 = vmatmul.mubr.bf16.gmra.mrb[0].mxu0 %v1333
        %v1369 = vpop.f32.mrb[0].mxu0
        %v1370 = vadd.f32 %v1318, %v1369
        %v1371 = vpop.f32.mrb[0].mxu0
        %v1372 = vpop.f32.mrb[0].mxu0
        %v1373 = vpop.f32.mrb[0].mxu0
        %1374 = vdwg.mxu0
        %v1375 = vld [vmem:[%s668] sm:$0xff]
        %v1376 = vpack.c.bf16 %v1375, %v1375
        %v1377 = vld [vmem:[%s11] sm:$0xf]
        %v1378 = vld [vmem:[%s11 + $0x4] sm:$0xf]
        %v1379 = vld [vmem:[%s11 + $0x8] sm:$0xf]
        %v1380 = vld [vmem:[%s11 + $0xc] sm:$0xf]
        %v1381 = vld [vmem:[%s12] sm:$0x1]
        %v1383 = vlaneseq
        %v1384 = vshrl.u32 %v1383, 7
        %v1385 = vsub.s32 0, %v1384
        %v1386 = vrot.slane %v1381, %v1385
        %v1392 = vunpack.c.l.b16 %v1377
        %v1393 = vunpack.c.l.b16 %v1378
        %v1394 = vunpack.c.l.b16 %v1379
        %v1395 = vunpack.c.l.b16 %v1380
        %v1396 = vpack.c.b16 %v1393, %v1392
        %v1397 = vpack.c.b16 %v1395, %v1394
        %v1401 = vsel %vm695, %v1376, 0
        %1403 = vmatprep.subr.bf16.mxu0 0
        %1404 = vmatpush1.bf16.msra.mxu0 %v1396
        %1405 = vmatprep.subr.bf16.mxu0 0
        %1406 = vmatpush1.bf16.msra.mxu0 %v1397
        %1407 = vmatprep.subr.bf16.mxu0 0
        %1408 = vmatpush1.bf16.msra.mxu0 0
        %1409 = vmatprep.subr.bf16.mxu0 0
        %1410 = vmatpush1.bf16.msra.mxu0 0
        %1411 = vmatprep.subr.bf16.mxu0 0
        %1412 = vmatpush1.bf16.msra.mxu0 0
        %1413 = vmatprep.subr.bf16.mxu0 0
        %1414 = vmatpush1.bf16.msra.mxu0 0
        %1415 = vmatprep.subr.bf16.mxu0 0
        %1416 = vmatpush1.bf16.msra.mxu0 0
        %1417 = vmatprep.subr.bf16.mxu0 0
        %1418 = vmatpush1.bf16.msra.mxu0 0
        %1419 = vmatprep.subr.bf16.mxu0 0
        %1420 = vmatpush1.bf16.msra.mxu0 0
        %1421 = vmatprep.subr.bf16.mxu0 0
        %1422 = vmatpush1.bf16.msra.mxu0 0
        %1423 = vmatprep.subr.bf16.mxu0 0
        %1424 = vmatpush1.bf16.msra.mxu0 0
        %1425 = vmatprep.subr.bf16.mxu0 0
        %1426 = vmatpush1.bf16.msra.mxu0 0
        %1427 = vmatprep.subr.bf16.mxu0 0
        %1428 = vmatpush1.bf16.msra.mxu0 0
        %1429 = vmatprep.subr.bf16.mxu0 0
        %1430 = vmatpush1.bf16.msra.mxu0 0
        %1431 = vmatprep.subr.bf16.mxu0 0
        %1432 = vmatpush1.bf16.msra.mxu0 0
        %1433 = vmatprep.subr.bf16.mxu0 0
        %1434 = vmatpush1.bf16.msra.mxu0 0
        %1435 = vmatprep.mubr.bf16.mxu0 0
        %1436 = vmatmul.mubr.bf16.gmra.mrb[0].mxu0 %v1401
        %v1437 = vpop.f32.mrb[0].mxu0
        %v1438 = vadd.f32 %v1386, %v1437
        %v1439 = vpop.f32.mrb[0].mxu0
        %v1440 = vpop.f32.mrb[0].mxu0
        %v1441 = vpop.f32.mrb[0].mxu0
        %1442 = vdwg.mxu0
        %v1443 = vmul.f32 %v1370, 0.35355338
        %v1444 = vpack.c.bf16 %v1443, %v1443
        %v1445 = vpack.c.bf16 %v1438, %v1438
        %v1447 = vsel %vm747, %v1444, 0
        %v1450 = vsel %vm747, %v1445, 0
        %1452 = vmatprep.subr.bf16.mxu0 0
        %1453 = vmatpush1.bf16.xpose.msra.mxu0 %v1450
        %1454 = vmatprep.subr.bf16.mxu0 0
        %1455 = vmatpush1.bf16.xpose.msra.mxu0 0
        %1456 = vmatprep.subr.bf16.mxu0 0
        %1457 = vmatpush1.bf16.xpose.msra.mxu0 0
        %1458 = vmatprep.subr.bf16.mxu0 0
        %1459 = vmatpush1.bf16.xpose.msra.mxu0 0
        %1460 = vmatprep.subr.bf16.mxu0 0
        %1461 = vmatpush1.bf16.xpose.msra.mxu0 0
        %1462 = vmatprep.subr.bf16.mxu0 0
        %1463 = vmatpush1.bf16.xpose.msra.mxu0 0
        %1464 = vmatprep.subr.bf16.mxu0 0
        %1465 = vmatpush1.bf16.xpose.msra.mxu0 0
        %1466 = vmatprep.subr.bf16.mxu0 0
        %1467 = vmatpush1.bf16.xpose.msra.mxu0 0
        %1468 = vmatprep.subr.bf16.mxu0 0
        %1469 = vmatpush1.bf16.xpose.msra.mxu0 0
        %1470 = vmatprep.subr.bf16.mxu0 0
        %1471 = vmatpush1.bf16.xpose.msra.mxu0 0
        %1472 = vmatprep.subr.bf16.mxu0 0
        %1473 = vmatpush1.bf16.xpose.msra.mxu0 0
        %1474 = vmatprep.subr.bf16.mxu0 0
        %1475 = vmatpush1.bf16.xpose.msra.mxu0 0
        %1476 = vmatprep.subr.bf16.mxu0 0
        %1477 = vmatpush1.bf16.xpose.msra.mxu0 0
        %1478 = vmatprep.subr.bf16.mxu0 0
        %1479 = vmatpush1.bf16.xpose.msra.mxu0 0
        %1480 = vmatprep.subr.bf16.mxu0 0
        %1481 = vmatpush1.bf16.xpose.msra.mxu0 0
        %1482 = vmatprep.subr.bf16.mxu0 0
        %1483 = vmatpush1.bf16.xpose.msra.mxu0 0
        %1484 = vmatprep.mubr.bf16.mxu0 0
        %1485 = vmatmul.mubr.bf16.gmra.mrb[0].mxu0 %v1447
        %v1486 = vpop.f32.mrb[0].mxu0
        %v1487 = vadd.f32 0.0, %v1486
        %v1488 = vpop.f32.mrb[0].mxu0
        %v1489 = vpop.f32.mrb[0].mxu0
        %v1490 = vpop.f32.mrb[0].mxu0
        %1491 = vdwg.mxu0
        %v1492 = vsel %vm747, %v1487, -inf
        %1493 = vmax.xlane.f32.xlu0 %v1492
        %v1494 = vpop.xlane.xlu0 %1493
        %v1495 = vsub.f32 %v1487, %v1494
        %v1496 = vmul.f32 %v1495, 1.442695
        %v1497 = vpow.pop %v1496
        %v1498 = vsel %vm747, %v1497, 0.0
        %1499 = vadd.xlane.f32.xlu0 %v1498
        %v1500 = vpop.xlane.xlu0 %1499
        %v1501 = vrcp.pop %v1500
        %v1502 = vmul.f32 %v1497, %v1501
        %v1503 = vpack.c.bf16 %v1502, %v1502
        %1505 = vrot.lane.b32.xlu0 %v1445, 96
        %v1506 = vpop.permute.xlu0 %1505
        %v1508 = vsel %vm747, %v1503, 0
        %v1511 = vsel %vm812, %v1506, 0
        %1513 = vmatprep.subr.bf16.mxu0 0
        %1514 = vmatpush1.bf16.msra.mxu0 %v1511
        %1515 = vmatprep.subr.bf16.mxu0 0
        %1516 = vmatpush1.bf16.msra.mxu0 0
        %1517 = vmatprep.subr.bf16.mxu0 0
        %1518 = vmatpush1.bf16.msra.mxu0 0
        %1519 = vmatprep.subr.bf16.mxu0 0
        %1520 = vmatpush1.bf16.msra.mxu0 0
        %1521 = vmatprep.subr.bf16.mxu0 0
        %1522 = vmatpush1.bf16.msra.mxu0 0
        %1523 = vmatprep.subr.bf16.mxu0 0
        %1524 = vmatpush1.bf16.msra.mxu0 0
        %1525 = vmatprep.subr.bf16.mxu0 0
        %1526 = vmatpush1.bf16.msra.mxu0 0
        %1527 = vmatprep.subr.bf16.mxu0 0
        %1528 = vmatpush1.bf16.msra.mxu0 0
        %1529 = vmatprep.subr.bf16.mxu0 0
        %1530 = vmatpush1.bf16.msra.mxu0 0
        %1531 = vmatprep.subr.bf16.mxu0 0
        %1532 = vmatpush1.bf16.msra.mxu0 0
        %1533 = vmatprep.subr.bf16.mxu0 0
        %1534 = vmatpush1.bf16.msra.mxu0 0
        %1535 = vmatprep.subr.bf16.mxu0 0
        %1536 = vmatpush1.bf16.msra.mxu0 0
        %1537 = vmatprep.subr.bf16.mxu0 0
        %1538 = vmatpush1.bf16.msra.mxu0 0
        %1539 = vmatprep.subr.bf16.mxu0 0
        %1540 = vmatpush1.bf16.msra.mxu0 0
        %1541 = vmatprep.subr.bf16.mxu0 0
        %1542 = vmatpush1.bf16.msra.mxu0 0
        %1543 = vmatprep.subr.bf16.mxu0 0
        %1544 = vmatpush1.bf16.msra.mxu0 0
        %1545 = vmatprep.mubr.bf16.mxu0 0
        %1546 = vmatmul.mubr.bf16.gmra.mrb[0].mxu0 %v1508
        %v1547 = vpop.f32.mrb[0].mxu0
        %v1548 = vadd.f32 0.0, %v1547
        %v1549 = vpop.f32.mrb[0].mxu0
        %v1550 = vpop.f32.mrb[0].mxu0
        %v1551 = vpop.f32.mrb[0].mxu0
        %1552 = vdwg.mxu0
        %1553 = vst.msk [vmem:[#allocation2] sm:$0xff] %vm747, %v1548
        %1555 = vrot.lane.b32.xlu0 %v1444, 120
        %v1556 = vpop.permute.xlu0 %1555
        %1557 = vrot.lane.b32.xlu0 %v1445, 120
        %v1558 = vpop.permute.xlu0 %1557
        %v1560 = vsel %vm747, %v1556, 0
        %v1563 = vsel %vm747, %v1558, 0
        %1565 = vmatprep.subr.bf16.mxu0 0
        %1566 = vmatpush1.bf16.xpose.msra.mxu0 %v1563
        %1567 = vmatprep.subr.bf16.mxu0 0
        %1568 = vmatpush1.bf16.xpose.msra.mxu0 0
        %1569 = vmatprep.subr.bf16.mxu0 0
        %1570 = vmatpush1.bf16.xpose.msra.mxu0 0
        %1571 = vmatprep.subr.bf16.mxu0 0
        %1572 = vmatpush1.bf16.xpose.msra.mxu0 0
        %1573 = vmatprep.subr.bf16.mxu0 0
        %1574 = vmatpush1.bf16.xpose.msra.mxu0 0
        %1575 = vmatprep.subr.bf16.mxu0 0
        %1576 = vmatpush1.bf16.xpose.msra.mxu0 0
        %1577 = vmatprep.subr.bf16.mxu0 0
        %1578 = vmatpush1.bf16.xpose.msra.mxu0 0
        %1579 = vmatprep.subr.bf16.mxu0 0
        %1580 = vmatpush1.bf16.xpose.msra.mxu0 0
        %1581 = vmatprep.subr.bf16.mxu0 0
        %1582 = vmatpush1.bf16.xpose.msra.mxu0 0
        %1583 = vmatprep.subr.bf16.mxu0 0
        %1584 = vmatpush1.bf16.xpose.msra.mxu0 0
        %1585 = vmatprep.subr.bf16.mxu0 0
        %1586 = vmatpush1.bf16.xpose.msra.mxu0 0
        %1587 = vmatprep.subr.bf16.mxu0 0
        %1588 = vmatpush1.bf16.xpose.msra.mxu0 0
        %1589 = vmatprep.subr.bf16.mxu0 0
        %1590 = vmatpush1.bf16.xpose.msra.mxu0 0
        %1591 = vmatprep.subr.bf16.mxu0 0
        %1592 = vmatpush1.bf16.xpose.msra.mxu0 0
        %1593 = vmatprep.subr.bf16.mxu0 0
        %1594 = vmatpush1.bf16.xpose.msra.mxu0 0
        %1595 = vmatprep.subr.bf16.mxu0 0
        %1596 = vmatpush1.bf16.xpose.msra.mxu0 0
        %1597 = vmatprep.mubr.bf16.mxu0 0
        %1598 = vmatmul.mubr.bf16.gmra.mrb[0].mxu0 %v1560
        %v1599 = vpop.f32.mrb[0].mxu0
        %v1600 = vadd.f32 0.0, %v1599
        %v1601 = vpop.f32.mrb[0].mxu0
        %v1602 = vpop.f32.mrb[0].mxu0
        %v1603 = vpop.f32.mrb[0].mxu0
        %1604 = vdwg.mxu0
        %v1605 = vsel %vm747, %v1600, -inf
        %1606 = vmax.xlane.f32.xlu0 %v1605
        %v1607 = vpop.xlane.xlu0 %1606
        %v1608 = vsub.f32 %v1600, %v1607
        %v1609 = vmul.f32 %v1608, 1.442695
        %v1610 = vpow.pop %v1609
        %v1611 = vsel %vm747, %v1610, 0.0
        %1612 = vadd.xlane.f32.xlu0 %v1611
        %v1613 = vpop.xlane.xlu0 %1612
        %v1614 = vrcp.pop %v1613
        %v1615 = vmul.f32 %v1610, %v1614
        %v1616 = vpack.c.bf16 %v1615, %v1615
        %1617 = vrot.lane.b32.xlu0 %v1445, 88
        %v1618 = vpop.permute.xlu0 %1617
        %v1620 = vsel %vm747, %v1616, 0
        %v1623 = vsel %vm812, %v1618, 0
        %1625 = vmatprep.subr.bf16.mxu0 0
        %1626 = vmatpush1.bf16.msra.mxu0 %v1623
        %1627 = vmatprep.subr.bf16.mxu0 0
        %1628 = vmatpush1.bf16.msra.mxu0 0
        %1629 = vmatprep.subr.bf16.mxu0 0
        %1630 = vmatpush1.bf16.msra.mxu0 0
        %1631 = vmatprep.subr.bf16.mxu0 0
        %1632 = vmatpush1.bf16.msra.mxu0 0
        %1633 = vmatprep.subr.bf16.mxu0 0
        %1634 = vmatpush1.bf16.msra.mxu0 0
        %1635 = vmatprep.subr.bf16.mxu0 0
        %1636 = vmatpush1.bf16.msra.mxu0 0
        %1637 = vmatprep.subr.bf16.mxu0 0
        %1638 = vmatpush1.bf16.msra.mxu0 0
        %1639 = vmatprep.subr.bf16.mxu0 0
        %1640 = vmatpush1.bf16.msra.mxu0 0
        %1641 = vmatprep.subr.bf16.mxu0 0
        %1642 = vmatpush1.bf16.msra.mxu0 0
        %1643 = vmatprep.subr.bf16.mxu0 0
        %1644 = vmatpush1.bf16.msra.mxu0 0
        %1645 = vmatprep.subr.bf16.mxu0 0
        %1646 = vmatpush1.bf16.msra.mxu0 0
        %1647 = vmatprep.subr.bf16.mxu0 0
        %1648 = vmatpush1.bf16.msra.mxu0 0
        %1649 = vmatprep.subr.bf16.mxu0 0
        %1650 = vmatpush1.bf16.msra.mxu0 0
        %1651 = vmatprep.subr.bf16.mxu0 0
        %1652 = vmatpush1.bf16.msra.mxu0 0
        %1653 = vmatprep.subr.bf16.mxu0 0
        %1654 = vmatpush1.bf16.msra.mxu0 0
        %1655 = vmatprep.subr.bf16.mxu0 0
        %1656 = vmatpush1.bf16.msra.mxu0 0
        %1657 = vmatprep.mubr.bf16.mxu0 0
        %1658 = vmatmul.mubr.bf16.gmra.mrb[0].mxu0 %v1620
        %v1659 = vpop.f32.mrb[0].mxu0
        %v1660 = vadd.f32 0.0, %v1659
        %v1661 = vpop.f32.mrb[0].mxu0
        %v1662 = vpop.f32.mrb[0].mxu0
        %v1663 = vpop.f32.mrb[0].mxu0
        %1664 = vdwg.mxu0
        %1666 = vrot.lane.b32.xlu0 %v1660, 8
        %v1667 = vpop.permute.xlu0 %1666
        %1669 = vst.msk [vmem:[#allocation2] sm:$0xff] %vm973, %v1667
        %1670 = vrot.lane.b32.xlu0 %v1444, 112
        %v1671 = vpop.permute.xlu0 %1670
        %1672 = vrot.lane.b32.xlu0 %v1445, 112
        %v1673 = vpop.permute.xlu0 %1672
        %v1675 = vsel %vm747, %v1671, 0
        %v1678 = vsel %vm747, %v1673, 0
        %1680 = vmatprep.subr.bf16.mxu0 0
        %1681 = vmatpush1.bf16.xpose.msra.mxu0 %v1678
        %1682 = vmatprep.subr.bf16.mxu0 0
        %1683 = vmatpush1.bf16.xpose.msra.mxu0 0
        %1684 = vmatprep.subr.bf16.mxu0 0
        %1685 = vmatpush1.bf16.xpose.msra.mxu0 0
        %1686 = vmatprep.subr.bf16.mxu0 0
        %1687 = vmatpush1.bf16.xpose.msra.mxu0 0
        %1688 = vmatprep.subr.bf16.mxu0 0
        %1689 = vmatpush1.bf16.xpose.msra.mxu0 0
        %1690 = vmatprep.subr.bf16.mxu0 0
        %1691 = vmatpush1.bf16.xpose.msra.mxu0 0
        %1692 = vmatprep.subr.bf16.mxu0 0
        %1693 = vmatpush1.bf16.xpose.msra.mxu0 0
        %1694 = vmatprep.subr.bf16.mxu0 0
        %1695 = vmatpush1.bf16.xpose.msra.mxu0 0
        %1696 = vmatprep.subr.bf16.mxu0 0
        %1697 = vmatpush1.bf16.xpose.msra.mxu0 0
        %1698 = vmatprep.subr.bf16.mxu0 0
        %1699 = vmatpush1.bf16.xpose.msra.mxu0 0
        %1700 = vmatprep.subr.bf16.mxu0 0
        %1701 = vmatpush1.bf16.xpose.msra.mxu0 0
        %1702 = vmatprep.subr.bf16.mxu0 0
        %1703 = vmatpush1.bf16.xpose.msra.mxu0 0
        %1704 = vmatprep.subr.bf16.mxu0 0
        %1705 = vmatpush1.bf16.xpose.msra.mxu0 0
        %1706 = vmatprep.subr.bf16.mxu0 0
        %1707 = vmatpush1.bf16.xpose.msra.mxu0 0
        %1708 = vmatprep.subr.bf16.mxu0 0
        %1709 = vmatpush1.bf16.xpose.msra.mxu0 0
        %1710 = vmatprep.subr.bf16.mxu0 0
        %1711 = vmatpush1.bf16.xpose.msra.mxu0 0
        %1712 = vmatprep.mubr.bf16.mxu0 0
        %1713 = vmatmul.mubr.bf16.gmra.mrb[0].mxu0 %v1675
        %v1714 = vpop.f32.mrb[0].mxu0
        %v1715 = vadd.f32 0.0, %v1714
        %v1716 = vpop.f32.mrb[0].mxu0
        %v1717 = vpop.f32.mrb[0].mxu0
        %v1718 = vpop.f32.mrb[0].mxu0
        %1719 = vdwg.mxu0
        %v1720 = vsel %vm747, %v1715, -inf
        %1721 = vmax.xlane.f32.xlu0 %v1720
        %v1722 = vpop.xlane.xlu0 %1721
        %v1723 = vsub.f32 %v1715, %v1722
        %v1724 = vmul.f32 %v1723, 1.442695
        %v1725 = vpow.pop %v1724
        %v1726 = vsel %vm747, %v1725, 0.0
        %1727 = vadd.xlane.f32.xlu0 %v1726
        %v1728 = vpop.xlane.xlu0 %1727
        %v1729 = vrcp.pop %v1728
        %v1730 = vmul.f32 %v1725, %v1729
        %v1731 = vpack.c.bf16 %v1730, %v1730
        %1732 = vrot.lane.b32.xlu0 %v1445, 80
        %v1733 = vpop.permute.xlu0 %1732
        %v1735 = vsel %vm747, %v1731, 0
        %v1738 = vsel %vm812, %v1733, 0
        %1740 = vmatprep.subr.bf16.mxu0 0
        %1741 = vmatpush1.bf16.msra.mxu0 %v1738
        %1742 = vmatprep.subr.bf16.mxu0 0
        %1743 = vmatpush1.bf16.msra.mxu0 0
        %1744 = vmatprep.subr.bf16.mxu0 0
        %1745 = vmatpush1.bf16.msra.mxu0 0
        %1746 = vmatprep.subr.bf16.mxu0 0
        %1747 = vmatpush1.bf16.msra.mxu0 0
        %1748 = vmatprep.subr.bf16.mxu0 0
        %1749 = vmatpush1.bf16.msra.mxu0 0
        %1750 = vmatprep.subr.bf16.mxu0 0
        %1751 = vmatpush1.bf16.msra.mxu0 0
        %1752 = vmatprep.subr.bf16.mxu0 0
        %1753 = vmatpush1.bf16.msra.mxu0 0
        %1754 = vmatprep.subr.bf16.mxu0 0
        %1755 = vmatpush1.bf16.msra.mxu0 0
        %1756 = vmatprep.subr.bf16.mxu0 0
        %1757 = vmatpush1.bf16.msra.mxu0 0
        %1758 = vmatprep.subr.bf16.mxu0 0
        %1759 = vmatpush1.bf16.msra.mxu0 0
        %1760 = vmatprep.subr.bf16.mxu0 0
        %1761 = vmatpush1.bf16.msra.mxu0 0
        %1762 = vmatprep.subr.bf16.mxu0 0
        %1763 = vmatpush1.bf16.msra.mxu0 0
        %1764 = vmatprep.subr.bf16.mxu0 0
        %1765 = vmatpush1.bf16.msra.mxu0 0
        %1766 = vmatprep.subr.bf16.mxu0 0
        %1767 = vmatpush1.bf16.msra.mxu0 0
        %1768 = vmatprep.subr.bf16.mxu0 0
        %1769 = vmatpush1.bf16.msra.mxu0 0
        %1770 = vmatprep.subr.bf16.mxu0 0
        %1771 = vmatpush1.bf16.msra.mxu0 0
        %1772 = vmatprep.mubr.bf16.mxu0 0
        %1773 = vmatmul.mubr.bf16.gmra.mrb[0].mxu0 %v1735
        %v1774 = vpop.f32.mrb[0].mxu0
        %v1775 = vadd.f32 0.0, %v1774
        %v1776 = vpop.f32.mrb[0].mxu0
        %v1777 = vpop.f32.mrb[0].mxu0
        %v1778 = vpop.f32.mrb[0].mxu0
        %1779 = vdwg.mxu0
        %1781 = vrot.lane.b32.xlu0 %v1775, 16
        %v1782 = vpop.permute.xlu0 %1781
        %1784 = vst.msk [vmem:[#allocation2] sm:$0xff] %vm1090, %v1782
        %1785 = vrot.lane.b32.xlu0 %v1444, 104
        %v1786 = vpop.permute.xlu0 %1785
        %1787 = vrot.lane.b32.xlu0 %v1445, 104
        %v1788 = vpop.permute.xlu0 %1787
        %v1790 = vsel %vm747, %v1786, 0
        %v1793 = vsel %vm747, %v1788, 0
        %1795 = vmatprep.subr.bf16.mxu0 0
        %1796 = vmatpush1.bf16.xpose.msra.mxu0 %v1793
        %1797 = vmatprep.subr.bf16.mxu0 0
        %1798 = vmatpush1.bf16.xpose.msra.mxu0 0
        %1799 = vmatprep.subr.bf16.mxu0 0
        %1800 = vmatpush1.bf16.xpose.msra.mxu0 0
        %1801 = vmatprep.subr.bf16.mxu0 0
        %1802 = vmatpush1.bf16.xpose.msra.mxu0 0
        %1803 = vmatprep.subr.bf16.mxu0 0
        %1804 = vmatpush1.bf16.xpose.msra.mxu0 0
        %1805 = vmatprep.subr.bf16.mxu0 0
        %1806 = vmatpush1.bf16.xpose.msra.mxu0 0
        %1807 = vmatprep.subr.bf16.mxu0 0
        %1808 = vmatpush1.bf16.xpose.msra.mxu0 0
        %1809 = vmatprep.subr.bf16.mxu0 0
        %1810 = vmatpush1.bf16.xpose.msra.mxu0 0
        %1811 = vmatprep.subr.bf16.mxu0 0
        %1812 = vmatpush1.bf16.xpose.msra.mxu0 0
        %1813 = vmatprep.subr.bf16.mxu0 0
        %1814 = vmatpush1.bf16.xpose.msra.mxu0 0
        %1815 = vmatprep.subr.bf16.mxu0 0
        %1816 = vmatpush1.bf16.xpose.msra.mxu0 0
        %1817 = vmatprep.subr.bf16.mxu0 0
        %1818 = vmatpush1.bf16.xpose.msra.mxu0 0
        %1819 = vmatprep.subr.bf16.mxu0 0
        %1820 = vmatpush1.bf16.xpose.msra.mxu0 0
        %1821 = vmatprep.subr.bf16.mxu0 0
        %1822 = vmatpush1.bf16.xpose.msra.mxu0 0
        %1823 = vmatprep.subr.bf16.mxu0 0
        %1824 = vmatpush1.bf16.xpose.msra.mxu0 0
        %1825 = vmatprep.subr.bf16.mxu0 0
        %1826 = vmatpush1.bf16.xpose.msra.mxu0 0
        %1827 = vmatprep.mubr.bf16.mxu0 0
        %1828 = vmatmul.mubr.bf16.gmra.mrb[0].mxu0 %v1790
        %v1829 = vpop.f32.mrb[0].mxu0
        %v1830 = vadd.f32 0.0, %v1829
        %v1831 = vpop.f32.mrb[0].mxu0
        %v1832 = vpop.f32.mrb[0].mxu0
        %v1833 = vpop.f32.mrb[0].mxu0
        %1834 = vdwg.mxu0
        %v1835 = vsel %vm747, %v1830, -inf
        %1836 = vmax.xlane.f32.xlu0 %v1835
        %v1837 = vpop.xlane.xlu0 %1836
        %v1838 = vsub.f32 %v1830, %v1837
        %v1839 = vmul.f32 %v1838, 1.442695
        %v1840 = vpow.pop %v1839
        %v1841 = vsel %vm747, %v1840, 0.0
        %1842 = vadd.xlane.f32.xlu0 %v1841
        %v1843 = vpop.xlane.xlu0 %1842
        %v1844 = vrcp.pop %v1843
        %v1845 = vmul.f32 %v1840, %v1844
        %v1846 = vpack.c.bf16 %v1845, %v1845
        %1847 = vrot.lane.b32.xlu0 %v1445, 72
        %v1848 = vpop.permute.xlu0 %1847
        %v1850 = vsel %vm747, %v1846, 0
        %v1853 = vsel %vm812, %v1848, 0
        %1855 = vmatprep.subr.bf16.mxu0 0
        %1856 = vmatpush1.bf16.msra.mxu0 %v1853
        %1857 = vmatprep.subr.bf16.mxu0 0
        %1858 = vmatpush1.bf16.msra.mxu0 0
        %1859 = vmatprep.subr.bf16.mxu0 0
        %1860 = vmatpush1.bf16.msra.mxu0 0
        %1861 = vmatprep.subr.bf16.mxu0 0
        %1862 = vmatpush1.bf16.msra.mxu0 0
        %1863 = vmatprep.subr.bf16.mxu0 0
        %1864 = vmatpush1.bf16.msra.mxu0 0
        %1865 = vmatprep.subr.bf16.mxu0 0
        %1866 = vmatpush1.bf16.msra.mxu0 0
        %1867 = vmatprep.subr.bf16.mxu0 0
        %1868 = vmatpush1.bf16.msra.mxu0 0
        %1869 = vmatprep.subr.bf16.mxu0 0
        %1870 = vmatpush1.bf16.msra.mxu0 0
        %1871 = vmatprep.subr.bf16.mxu0 0
        %1872 = vmatpush1.bf16.msra.mxu0 0
        %1873 = vmatprep.subr.bf16.mxu0 0
        %1874 = vmatpush1.bf16.msra.mxu0 0
        %1875 = vmatprep.subr.bf16.mxu0 0
        %1876 = vmatpush1.bf16.msra.mxu0 0
        %1877 = vmatprep.subr.bf16.mxu0 0
        %1878 = vmatpush1.bf16.msra.mxu0 0
        %1879 = vmatprep.subr.bf16.mxu0 0
        %1880 = vmatpush1.bf16.msra.mxu0 0
        %1881 = vmatprep.subr.bf16.mxu0 0
        %1882 = vmatpush1.bf16.msra.mxu0 0
        %1883 = vmatprep.subr.bf16.mxu0 0
        %1884 = vmatpush1.bf16.msra.mxu0 0
        %1885 = vmatprep.subr.bf16.mxu0 0
        %1886 = vmatpush1.bf16.msra.mxu0 0
        %1887 = vmatprep.mubr.bf16.mxu0 0
        %1888 = vmatmul.mubr.bf16.gmra.mrb[0].mxu0 %v1850
        %v1889 = vpop.f32.mrb[0].mxu0
        %v1890 = vadd.f32 0.0, %v1889
        %v1891 = vpop.f32.mrb[0].mxu0
        %v1892 = vpop.f32.mrb[0].mxu0
        %v1893 = vpop.f32.mrb[0].mxu0
        %1894 = vdwg.mxu0
        %1896 = vrot.lane.b32.xlu0 %v1890, 24
        %v1897 = vpop.permute.xlu0 %1896
        %1899 = vst.msk [vmem:[#allocation2] sm:$0xff] %vm1207, %v1897
        %v1900 = vld [vmem:[#allocation2] sm:$0xff]
        %v1901 = vpack.c.bf16 %v1900, %v1900
        %v1902 = vld [vmem:[%s13] sm:$0xf]
        %v1903 = vld [vmem:[%s13 + $0x4] sm:$0xf]
        %v1904 = vld [vmem:[%s13 + $0x8] sm:$0xf]
        %v1905 = vld [vmem:[%s13 + $0xc] sm:$0xf]
        %v1906 = vld [vmem:[%s14] sm:$0x1]
        %v1908 = vlaneseq
        %v1909 = vshrl.u32 %v1908, 7
        %v1910 = vsub.s32 0, %v1909
        %v1911 = vrot.slane %v1906, %v1910
        %v1917 = vunpack.c.l.b16 %v1902
        %v1918 = vunpack.c.l.b16 %v1903
        %v1919 = vunpack.c.l.b16 %v1904
        %v1920 = vunpack.c.l.b16 %v1905
        %v1921 = vpack.c.b16 %v1918, %v1917
        %v1922 = vpack.c.b16 %v1920, %v1919
        %v1926 = vsel %vm695, %v1901, 0
        %1928 = vmatprep.subr.bf16.mxu0 0
        %1929 = vmatpush1.bf16.msra.mxu0 %v1921
        %1930 = vmatprep.subr.bf16.mxu0 0
        %1931 = vmatpush1.bf16.msra.mxu0 %v1922
        %1932 = vmatprep.subr.bf16.mxu0 0
        %1933 = vmatpush1.bf16.msra.mxu0 0
        %1934 = vmatprep.subr.bf16.mxu0 0
        %1935 = vmatpush1.bf16.msra.mxu0 0
        %1936 = vmatprep.subr.bf16.mxu0 0
        %1937 = vmatpush1.bf16.msra.mxu0 0
        %1938 = vmatprep.subr.bf16.mxu0 0
        %1939 = vmatpush1.bf16.msra.mxu0 0
        %1940 = vmatprep.subr.bf16.mxu0 0
        %1941 = vmatpush1.bf16.msra.mxu0 0
        %1942 = vmatprep.subr.bf16.mxu0 0
        %1943 = vmatpush1.bf16.msra.mxu0 0
        %1944 = vmatprep.subr.bf16.mxu0 0
        %1945 = vmatpush1.bf16.msra.mxu0 0
        %1946 = vmatprep.subr.bf16.mxu0 0
        %1947 = vmatpush1.bf16.msra.mxu0 0
        %1948 = vmatprep.subr.bf16.mxu0 0
        %1949 = vmatpush1.bf16.msra.mxu0 0
        %1950 = vmatprep.subr.bf16.mxu0 0
        %1951 = vmatpush1.bf16.msra.mxu0 0
        %1952 = vmatprep.subr.bf16.mxu0 0
        %1953 = vmatpush1.bf16.msra.mxu0 0
        %1954 = vmatprep.subr.bf16.mxu0 0
        %1955 = vmatpush1.bf16.msra.mxu0 0
        %1956 = vmatprep.subr.bf16.mxu0 0
        %1957 = vmatpush1.bf16.msra.mxu0 0
        %1958 = vmatprep.subr.bf16.mxu0 0
        %1959 = vmatpush1.bf16.msra.mxu0 0
        %1960 = vmatprep.mubr.bf16.mxu0 0
        %1961 = vmatmul.mubr.bf16.gmra.mrb[0].mxu0 %v1926
        %v1962 = vpop.f32.mrb[0].mxu0
        %v1963 = vadd.f32 %v1911, %v1962
        %v1964 = vpop.f32.mrb[0].mxu0
        %v1965 = vpop.f32.mrb[0].mxu0
        %v1966 = vpop.f32.mrb[0].mxu0
        %1967 = vdwg.mxu0
        %v1968 = vadd.f32 %v1900, %v1963
        %v1969 = vsel %vm695, %v1968, 0.0
        %1970 = vadd.xlane.f32.xlu0 %v1969
        %v1971 = vpop.xlane.xlu0 %1970
        %v1972 = vmul.f32 %v1971, %v1281
        %v1973 = vsub.f32 %v1968, %v1972
        %v1974 = vmul.f32 %v1973, %v1973
        %v1975 = vsel %vm695, %v1974, 0.0
        %1976 = vadd.xlane.f32.xlu0 %v1975
        %v1977 = vpop.xlane.xlu0 %1976
        %v1978 = vmul.f32 %v1977, %v1281
        %v1979 = vadd.f32 %v1978, 1e-05
        %v1980 = vrsqrt.pop %v1979
        %v1981 = vmul.f32 %v1973, %v1980
        %v1982 = vld [vmem:[%s15] sm:$0x1]
        %v1984 = vlaneseq
        %v1985 = vshrl.u32 %v1984, 7
        %v1986 = vsub.s32 0, %v1985
        %v1987 = vrot.slane %v1982, %v1986
        %v1989 = vmul.f32 %v1981, %v1987
        %v1990 = vld [vmem:[%s16] sm:$0x1]
        %v1992 = vlaneseq
        %v1993 = vshrl.u32 %v1992, 7
        %v1994 = vsub.s32 0, %v1993
        %v1995 = vrot.slane %v1990, %v1994
        %v1997 = vadd.f32 %v1989, %v1995
        %v1998 = vpack.c.bf16 %v1997, %v1997
        %v1999 = vld [vmem:[%s17] sm:$0xf]
        %v2000 = vld [vmem:[%s17 + $0x4] sm:$0xf]
        %v2001 = vld [vmem:[%s17 + $0x8] sm:$0xf]
        %v2002 = vld [vmem:[%s17 + $0xc] sm:$0xf]
        %v2003 = vld [vmem:[%s18] sm:$0x1]
        %v2005 = vlaneseq
        %v2006 = vshrl.u32 %v2005, 7
        %v2007 = vsub.s32 0, %v2006
        %v2008 = vrot.slane %v2003, %v2007
        %v2014 = vunpack.c.l.b16 %v1999
        %v2015 = vunpack.c.l.b16 %v2000
        %v2016 = vunpack.c.l.b16 %v2001
        %v2017 = vunpack.c.l.b16 %v2002
        %v2018 = vpack.c.b16 %v2015, %v2014
        %v2019 = vpack.c.b16 %v2017, %v2016
        %v2023 = vsel %vm695, %v1998, 0
        %2025 = vmatprep.subr.bf16.mxu0 0
        %2026 = vmatpush1.bf16.msra.mxu0 %v2018
        %2027 = vmatprep.subr.bf16.mxu0 0
        %2028 = vmatpush1.bf16.msra.mxu0 %v2019
        %2029 = vmatprep.subr.bf16.mxu0 0
        %2030 = vmatpush1.bf16.msra.mxu0 0
        %2031 = vmatprep.subr.bf16.mxu0 0
        %2032 = vmatpush1.bf16.msra.mxu0 0
        %2033 = vmatprep.subr.bf16.mxu0 0
        %2034 = vmatpush1.bf16.msra.mxu0 0
        %2035 = vmatprep.subr.bf16.mxu0 0
        %2036 = vmatpush1.bf16.msra.mxu0 0
        %2037 = vmatprep.subr.bf16.mxu0 0
        %2038 = vmatpush1.bf16.msra.mxu0 0
        %2039 = vmatprep.subr.bf16.mxu0 0
        %2040 = vmatpush1.bf16.msra.mxu0 0
        %2041 = vmatprep.subr.bf16.mxu0 0
        %2042 = vmatpush1.bf16.msra.mxu0 0
        %2043 = vmatprep.subr.bf16.mxu0 0
        %2044 = vmatpush1.bf16.msra.mxu0 0
        %2045 = vmatprep.subr.bf16.mxu0 0
        %2046 = vmatpush1.bf16.msra.mxu0 0
        %2047 = vmatprep.subr.bf16.mxu0 0
        %2048 = vmatpush1.bf16.msra.mxu0 0
        %2049 = vmatprep.subr.bf16.mxu0 0
        %2050 = vmatpush1.bf16.msra.mxu0 0
        %2051 = vmatprep.subr.bf16.mxu0 0
        %2052 = vmatpush1.bf16.msra.mxu0 0
        %2053 = vmatprep.subr.bf16.mxu0 0
        %2054 = vmatpush1.bf16.msra.mxu0 0
        %2055 = vmatprep.subr.bf16.mxu0 0
        %2056 = vmatpush1.bf16.msra.mxu0 0
        %2057 = vmatprep.mubr.bf16.mxu0 0
        %2058 = vmatmul.mubr.bf16.gmra.mrb[0].mxu0 %v2023
        %v2059 = vpop.f32.mrb[0].mxu0
        %v2060 = vadd.f32 %v2008, %v2059
        %v2061 = vpop.f32.mrb[0].mxu0
        %v2062 = vpop.f32.mrb[0].mxu0
        %v2063 = vpop.f32.mrb[0].mxu0
        %2064 = vdwg.mxu0
        %v2065 = vmax.f32 %v2060, 0.0
        %v2066 = vpack.c.bf16 %v2065, %v2065
        %v2067 = vld [vmem:[%s19] sm:$0xf]
        %v2068 = vld [vmem:[%s19 + $0x4] sm:$0xf]
        %v2069 = vld [vmem:[%s19 + $0x8] sm:$0xf]
        %v2070 = vld [vmem:[%s19 + $0xc] sm:$0xf]
        %v2071 = vld [vmem:[%s19 + $0x10] sm:$0xf]
        %v2072 = vld [vmem:[%s19 + $0x14] sm:$0xf]
        %v2073 = vld [vmem:[%s19 + $0x18] sm:$0xf]
        %v2074 = vld [vmem:[%s19 + $0x1c] sm:$0xf]
        %v2075 = vld [vmem:[%s19 + $0x20] sm:$0xf]
        %v2076 = vld [vmem:[%s19 + $0x24] sm:$0xf]
        %v2077 = vld [vmem:[%s19 + $0x28] sm:$0xf]
        %v2078 = vld [vmem:[%s19 + $0x2c] sm:$0xf]
        %v2079 = vld [vmem:[%s19 + $0x30] sm:$0xf]
        %v2080 = vld [vmem:[%s19 + $0x34] sm:$0xf]
        %v2081 = vld [vmem:[%s19 + $0x38] sm:$0xf]
        %v2082 = vld [vmem:[%s19 + $0x3c] sm:$0xf]
        %v2083 = vld [vmem:[%s20] sm:$0x1]
        %v2085 = vlaneseq
        %v2086 = vshrl.u32 %v2085, 7
        %v2087 = vsub.s32 0, %v2086
        %v2088 = vrot.slane %v2083, %v2087
        %v2106 = vunpack.c.l.b16 %v2067
        %v2107 = vunpack.c.l.b16 %v2068
        %v2108 = vunpack.c.l.b16 %v2069
        %v2109 = vunpack.c.l.b16 %v2070
        %v2110 = vunpack.c.l.b16 %v2071
        %v2111 = vunpack.c.l.b16 %v2072
        %v2112 = vunpack.c.l.b16 %v2073
        %v2113 = vunpack.c.l.b16 %v2074
        %v2114 = vunpack.c.l.b16 %v2075
        %v2115 = vunpack.c.l.b16 %v2076
        %v2116 = vunpack.c.l.b16 %v2077
        %v2117 = vunpack.c.l.b16 %v2078
        %v2118 = vunpack.c.l.b16 %v2079
        %v2119 = vunpack.c.l.b16 %v2080
        %v2120 = vunpack.c.l.b16 %v2081
        %v2121 = vunpack.c.l.b16 %v2082
        %v2122 = vpack.c.b16 %v2107, %v2106
        %v2123 = vpack.c.b16 %v2109, %v2108
        %v2124 = vpack.c.b16 %v2111, %v2110
        %v2125 = vpack.c.b16 %v2113, %v2112
        %v2126 = vpack.c.b16 %v2115, %v2114
        %v2127 = vpack.c.b16 %v2117, %v2116
        %v2128 = vpack.c.b16 %v2119, %v2118
        %v2129 = vpack.c.b16 %v2121, %v2120
        %2138 = vmatprep.subr.bf16.mxu0 0
        %2139 = vmatpush1.bf16.msra.mxu0 %v2122
        %2140 = vmatprep.subr.bf16.mxu0 0
        %2141 = vmatpush1.bf16.msra.mxu0 %v2123
        %2142 = vmatprep.subr.bf16.mxu0 0
        %2143 = vmatpush1.bf16.msra.mxu0 %v2124
        %2144 = vmatprep.subr.bf16.mxu0 0
        %2145 = vmatpush1.bf16.msra.mxu0 %v2125
        %2146 = vmatprep.subr.bf16.mxu0 0
        %2147 = vmatpush1.bf16.msra.mxu0 %v2126
        %2148 = vmatprep.subr.bf16.mxu0 0
        %2149 = vmatpush1.bf16.msra.mxu0 %v2127
        %2150 = vmatprep.subr.bf16.mxu0 0
        %2151 = vmatpush1.bf16.msra.mxu0 %v2128
        %2152 = vmatprep.subr.bf16.mxu0 0
        %2153 = vmatpush1.bf16.msra.mxu0 %v2129
        %2154 = vmatprep.subr.bf16.mxu0 0
        %2155 = vmatpush1.bf16.msra.mxu0 0
        %2156 = vmatprep.subr.bf16.mxu0 0
        %2157 = vmatpush1.bf16.msra.mxu0 0
        %2158 = vmatprep.subr.bf16.mxu0 0
        %2159 = vmatpush1.bf16.msra.mxu0 0
        %2160 = vmatprep.subr.bf16.mxu0 0
        %2161 = vmatpush1.bf16.msra.mxu0 0
        %2162 = vmatprep.subr.bf16.mxu0 0
        %2163 = vmatpush1.bf16.msra.mxu0 0
        %2164 = vmatprep.subr.bf16.mxu0 0
        %2165 = vmatpush1.bf16.msra.mxu0 0
        %2166 = vmatprep.subr.bf16.mxu0 0
        %2167 = vmatpush1.bf16.msra.mxu0 0
        %2168 = vmatprep.subr.bf16.mxu0 0
        %2169 = vmatpush1.bf16.msra.mxu0 0
        %2170 = vmatprep.mubr.bf16.mxu0 0
        %2171 = vmatmul.mubr.bf16.gmra.mrb[0].mxu0 %v2066
        %v2172 = vpop.f32.mrb[0].mxu0
        %v2173 = vadd.f32 %v2088, %v2172
        %v2174 = vpop.f32.mrb[0].mxu0
        %v2175 = vpop.f32.mrb[0].mxu0
        %v2176 = vpop.f32.mrb[0].mxu0
        %2177 = vdwg.mxu0
        %2178 = vst.msk [vmem:[%s660] sm:$0xff] %vm695, %v2173
        %s2179 = sand.u32 %s494, 1
        %s2180 = scalar_lea.sflag [#allocation4], %s2179
        %s2181 = sand.u32 %s494, 1
        %s2182 = smul.addr %s2181, 8
        %s2183 = scalar_lea.vmem [#allocation3], %s2182
        // Predicated region
        $region105: #{decoder_layer.1} parent=103 // pred_check
          %p2184 = pneg %p504
        $region106: #{decoder_layer.1} parent=103 // pred_check_branch
          %2186 = sbr.rel (%p2184) target = $region108
        $region107: #{decoder_layer.1} parent=103 // pred_region
          %s2188 = ssub.s32 128, 128
          %2189 = vsyncadd %s2180, %s2188
          %s2190 = smul.addr %s35, 128
          %s2191 = scalar_lea.hbm %s21, %s2190
          %s2193 = sshll.u32 %s2183, 4
          %s2194 = int_to_ptr.vmem [resolvable:$true] %s2193
          %2196 = dma.vmem_to_hbm [thread:$0]  %s2194, 128, %s2191, %s2180
        $region108: #{decoder_layer.1} parent=103 // pred_fallthru
          _
      $region104: #{decoder_layer.1} parent=5 // pred_fallthru
        _
      %p2197 = scmp.le.s32.totalorder 2, %s30
      // Predicated region
      $region109: #{decoder_layer.1} parent=5 // pred_check
        %p2198 = pneg %p2197
      $region110: #{decoder_layer.1} parent=5 // pred_check_branch
        %2200 = sbr.rel (%p2198) target = $region112
      $region111: #{decoder_layer.1} parent=5 // pred_region
        %s2201 = ssub.s32 %s30, 2
        // Predicated region
        $region113: #{decoder_layer.1} parent=111 // pred_check
          %p2202 = pneg %p510
        $region114: #{decoder_layer.1} parent=111 // pred_check_branch
          %2204 = sbr.rel (%p2202) target = $region116
        $region115: #{decoder_layer.1} parent=111 // pred_region
          %s2205 = sand.u32 %s495, 1
          %s2206 = scalar_lea.sflag [#allocation4], %s2205
          %s2207 = sand.u32 %s495, 1
          %s2208 = smul.addr %s2207, 8
          %s2209 = scalar_lea.vmem [#allocation3], %s2208
          %2210 = dma.done %s2206, 128
        $region116: #{decoder_layer.1} parent=111 // pred_fallthru
          _
      $region112: #{decoder_layer.1} parent=5 // pred_fallthru
        _
    $region6: #{decoder_layer.1} parent=1 // loop_footer
      %s34 = sadd.s32 1, %s30
    $region7: #{decoder_layer.1} parent=1 // loop_footer_branch
      %29 = sbr.rel target = $region3
    $region8: #{decoder_layer.1} parent=1 // loop_exit
      _
    %2211 = vsyncpa [#allocation4], 1
    %s2212 = scalar_lea.sflag [#allocation4], 1
    %2213 = vsyncpa %s2212, 1

</llo_original>
